<compile_context>
chip_gen: v7x
topology: tpu7x:2x2x1
jax: 0.10.0
libtpu: 0.0.40
codegen_flags: <defaults>
</compile_context>

<pallas_src>
import jax
import jax.numpy as jnp
from jax import lax
from jax.experimental import pallas as pl
from jax.experimental.pallas import tpu as pltpu


def attention_kernel(x_ref, w_ref, b_ref, o_ref):
    # x_ref: (TB, S, F) VMEM   w_ref: (1, 1, F) VMEM   b_ref: (1,) SMEM
    # o_ref: (TB, 1, F) VMEM
    TB, _, F = x_ref.shape
    x = x_ref[...].astype(jnp.float32)                       # (TB, S, F)
    w = w_ref[...].astype(jnp.float32)                       # (1, 1, F)
    bias = b_ref[0]

    # eij[b, 0, s] = sum_f x[b, s, f] * w[f]   (batched (1,F)@(F,S) on the MXU)
    w3 = jnp.broadcast_to(w, (TB, 1, F))
    eij = jnp.einsum("bkf,bsf->bks", w3, x,
                     preferred_element_type=jnp.float32,
                     precision=lax.Precision.HIGHEST)         # (TB, 1, S)
    eij = jnp.tanh(eij + bias)

    a = jnp.exp(eij)                                          # (TB, 1, S)
    denom = jnp.sum(a, axis=-1, keepdims=True)                # (TB, 1, 1)
    # Exact reciprocal keeps the kernel within ~1e-6 of the f32 reference;
    # pl.reciprocal(..., approx=True) would use the approximate EUP path at the
    # cost of ~1e-4 relative error.
    a = a * pl.reciprocal(denom, approx=False) + 1e-10        # (TB, 1, S)

    # out[b, 0, f] = sum_s a[b, 0, s] * x[b, s, f]  (batched (1,S)@(S,F) matmul)
    out = jnp.einsum("bks,bsf->bkf", a, x,
                     preferred_element_type=jnp.float32,
                     precision=lax.Precision.HIGHEST)         # (TB, 1, F)
    o_ref[...] = out.astype(o_ref.dtype)


def attention_forward(x, weight, b, *, block_b=None):
    """x: (B, S, F); weight: (F, 1) (torch layout); b: shape-(1,) bias."""
    B, S, F = x.shape
    out_dtype = x.dtype

    w_row = weight.astype(jnp.float32).reshape(1, 1, F)       # lane-dense row
    b_arr = jnp.reshape(b, (1,)).astype(jnp.float32)

    if block_b is None:
        # VMEM footprint of one batch row, padded to (8, 128) f32 tiles.
        row_bytes = ((S + 7) // 8) * 8 * ((F + 127) // 128) * 128 * 4
        # ~6 MiB per pipelined x buffer keeps 2x double-buffered inputs plus the
        # in-kernel temporaries well under the scoped VMEM budget on every
        # generation (v7x has only 64 MiB physical / 32 MiB default scoped).
        block_b = max(1, min(512, (6 * 1024 * 1024) // max(row_bytes, 1)))
    block_b = max(1, min(block_b, B))

    grid_b = pl.cdiv(B, block_b)
    B_pad = grid_b * block_b
    if B_pad != B:
        # Ragged tail: pad with zeros (finite everywhere), slice off afterwards.
        x = jnp.pad(x, ((0, B_pad - B), (0, 0), (0, 0)))

    itemsize = jnp.dtype(x.dtype).itemsize
    cost = pl.CostEstimate(
        flops=4 * B_pad * S * F,                    # two matmuls, 2 flops / MAC
        transcendentals=2 * B_pad * S + B_pad,      # tanh + exp + reciprocal
        bytes_accessed=B_pad * S * F * itemsize + B_pad * F * itemsize + F * 4,
    )

    out3 = pl.pallas_call(
        attention_kernel,
        out_shape=jax.ShapeDtypeStruct((B_pad, 1, F), out_dtype),
        grid=(grid_b,),
        in_specs=[
            pl.BlockSpec((block_b, S, F), lambda i: (i, 0, 0)),    # x tile
            pl.BlockSpec((1, 1, F), lambda i: (0, 0, 0)),          # weight row
            pl.BlockSpec(memory_space=pltpu.MemorySpace.SMEM),     # scalar bias
        ],
        out_specs=pl.BlockSpec((block_b, 1, F), lambda i: (i, 0, 0)),
        compiler_params=pltpu.CompilerParams(
            dimension_semantics=("parallel",),      # megacore-shard batch (v7x)
            vmem_limit_bytes=48 * 1024 * 1024,
        ),
        cost_estimate=cost,
    )(x, w_row, b_arr)

    return out3.reshape(B_pad, F)[:B]


def _reference(x, weight, b):
    # Pure-JAX mirror of the PyTorch forward (mask=None path), plain f32
    # elementwise math so it is faithful to the module's semantics.
    F = x.shape[-1]
    eij = jnp.sum(x * weight.reshape(1, 1, F), axis=-1) + b
    eij = jnp.tanh(eij)
    a = jnp.exp(eij)
    a = a / jnp.sum(a, axis=1, keepdims=True) + 1e-10
    return jnp.sum(x * a[:, :, None], axis=1)


if __name__ == "__main__":
    key = jax.random.PRNGKey(0)
    kx, kw = jax.random.split(key)

    B, S, F = 2, 8, 32                  # batch, step_dim, feature_dim
    x = jax.random.normal(kx, (B, S, F), dtype=jnp.float32)

    # Parameter shapes match Attention.__init__:
    #   weight: (feature_dim, 1) xavier_uniform_;  b: shape-(1,) bias.
    bound = float(jnp.sqrt(6.0 / (F + 1)))
    weight = jax.random.uniform(kw, (F, 1), dtype=jnp.float32,
                                minval=-bound, maxval=bound)
    b = jnp.full((1,), 0.1, dtype=jnp.float32)   # nonzero to exercise the bias

    # TODO(synk): optional `mask` argument of forward() not implemented (mask=None path only).

    out = attention_forward(x, weight, b)
    out = jax.block_until_ready(out)
    ref = _reference(x, weight, b[0])
    assert out.shape == (B, F)
    assert jnp.allclose(out, ref, atol=1e-5, rtol=1e-5)

    # Ragged-batch path: B not a multiple of the batch tile (exercises padding).
    B2 = 5
    x2 = jax.random.normal(jax.random.PRNGKey(1), (B2, S, F), dtype=jnp.float32)
    out2 = jax.block_until_ready(attention_forward(x2, weight, b, block_b=2))
    ref2 = _reference(x2, weight, b[0])
    assert out2.shape == (B2, F)
    assert jnp.allclose(out2, ref2, atol=1e-5, rtol=1e-5)

    print("KERNEL_OK")
</pallas_src>

<mosaic_0001>
module attributes {stable_mosaic.version = 11 : i64} {
  func.func @attention_kernel(%arg0: i32, %arg1: memref<2x8x32xf32, #tpu.memory_space<vmem>>, %arg2: memref<1x1x32xf32, #tpu.memory_space<vmem>>, %arg3: memref<1xf32, #tpu.memory_space<smem>>, %arg4: memref<2x1x32xf32, #tpu.memory_space<vmem>>) attributes {dimension_semantics = [#tpu.dimension_semantics<parallel>], iteration_bounds = array<i64: 1>, scalar_prefetch = 0 : i64, scratch_operands = 0 : i64, tpu.core_type = #tpu.core_type<tc>, window_params = [{transform_indices = @transform_0, window_bounds = array<i64: 2, 8, 32>}, {pipeline_mode = #tpu.pipeline_mode<synchronous>, transform_indices = @transform_1, window_bounds = array<i64: 1, 1, 32>}, {transform_indices = @transform_2, window_bounds = array<i64: 1>}, {transform_indices = @transform_3, window_bounds = array<i64: 2, 1, 32>}]} {
    %c0 = arith.constant 0 : index
    %c0_0 = arith.constant 0 : index
    %c0_1 = arith.constant 0 : index
    %0 = vector.load %arg1[%c0, %c0_0, %c0_1] : memref<2x8x32xf32, #tpu.memory_space<vmem>>, vector<2x8x32xf32>
    %c0_2 = arith.constant 0 : index
    %c0_3 = arith.constant 0 : index
    %c0_4 = arith.constant 0 : index
    %1 = vector.load %arg2[%c0_2, %c0_3, %c0_4] : memref<1x1x32xf32, #tpu.memory_space<vmem>>, vector<1x1x32xf32>
    %c0_5 = arith.constant 0 : index
    %2 = memref.load %arg3[%c0_5] : memref<1xf32, #tpu.memory_space<smem>>
    %3 = vector.shape_cast %1 : vector<1x1x32xf32> to vector<1x1x32xf32>
    %4 = vector.broadcast %3 : vector<1x1x32xf32> to vector<2x1x32xf32>
    "tpu.trace_start"() <{level = 10 : i32, message = "bkf,bsf->bks"}> : () -> ()
    %cst = arith.constant dense<0.000000e+00> : vector<2x1x8xf32>
    %5 = tpu.matmul %4, %0, %cst {dimension_numbers = #tpu.dot_dimension_numbers<[2], [2], [1], [1], [0, 0, 0, 1, 1, 1], [0], [0]>, precision = #tpu.contract_precision<fp32>} : vector<2x1x32xf32>, vector<2x8x32xf32>, vector<2x1x8xf32> -> vector<2x1x8xf32>
    "tpu.trace_stop"() : () -> ()
    %6 = vector.broadcast %2 : f32 to vector<2x1x8xf32>
    %7 = arith.addf %5, %6 : vector<2x1x8xf32>
    %8 = math.tanh %7 : vector<2x1x8xf32>
    %9 = math.exp %8 : vector<2x1x8xf32>
    %cst_6 = arith.constant dense<0.000000e+00> : vector<2x1xf32>
    %10 = vector.multi_reduction <add>, %9, %cst_6 [2] : vector<2x1x8xf32> to vector<2x1xf32>
    %11 = vector.shape_cast %10 : vector<2x1xf32> to vector<2x1x1xf32>
    %12 = tpu.reciprocal %11 : vector<2x1x1xf32> -> vector<2x1x1xf32>
    %13 = vector.broadcast %12 : vector<2x1x1xf32> to vector<2x1x8xf32>
    %14 = arith.mulf %9, %13 : vector<2x1x8xf32>
    %cst_7 = arith.constant 1.000000e-10 : f32
    %15 = vector.broadcast %cst_7 : f32 to vector<2x1x8xf32>
    %16 = arith.addf %14, %15 : vector<2x1x8xf32>
    "tpu.trace_start"() <{level = 10 : i32, message = "bks,bsf->bkf"}> : () -> ()
    %cst_8 = arith.constant dense<0.000000e+00> : vector<2x1x32xf32>
    %17 = tpu.matmul %16, %0, %cst_8 {dimension_numbers = #tpu.dot_dimension_numbers<[2], [1], [1], [2], [0, 0, 0, 1, 1, 2], [0], [0]>, precision = #tpu.contract_precision<fp32>} : vector<2x1x8xf32>, vector<2x8x32xf32>, vector<2x1x32xf32> -> vector<2x1x32xf32>
    "tpu.trace_stop"() : () -> ()
    %c0_9 = arith.constant 0 : index
    %c0_10 = arith.constant 0 : index
    %c0_11 = arith.constant 0 : index
    %18 = vector.load %arg4[%c0_9, %c0_10, %c0_11] : memref<2x1x32xf32, #tpu.memory_space<vmem>>, vector<2x1x32xf32>
    tpu.vector_store %arg4[%c0_9, %c0_10, %c0_11], %17 {strides = array<i32>} : memref<2x1x32xf32, #tpu.memory_space<vmem>>, vector<2x1x32xf32>,
    return
  }
  func.func @transform_0(%arg0: i32) -> (i32, i32, i32) {
    %c0_i32 = arith.constant 0 : i32
    %c0_i32_0 = arith.constant 0 : i32
    %c0_i32_1 = arith.constant 0 : i32
    return %arg0, %c0_i32, %c0_i32_0 : i32, i32, i32
  }
  func.func @transform_1(%arg0: i32) -> (i32, i32, i32) {
    %c0_i32 = arith.constant 0 : i32
    %c0_i32_0 = arith.constant 0 : i32
    %c0_i32_1 = arith.constant 0 : i32
    %c0_i32_2 = arith.constant 0 : i32
    return %c0_i32, %c0_i32_0, %c0_i32_1 : i32, i32, i32
  }
  func.func @transform_2(%arg0: i32) -> i32 {
    %c0_i32 = arith.constant 0 : i32
    %c0_i32_0 = arith.constant 0 : i32
    return %c0_i32 : i32
  }
  func.func @transform_3(%arg0: i32) -> (i32, i32, i32) {
    %c0_i32 = arith.constant 0 : i32
    %c0_i32_0 = arith.constant 0 : i32
    %c0_i32_1 = arith.constant 0 : i32
    return %arg0, %c0_i32, %c0_i32_0 : i32, i32, i32
  }
}

</mosaic_0001>

<llo_original>
// kernel: tpu_custom_call.1
$region0: #{tpu_custom_call.1}
  #allocation0 [shape = 'u32[]', space=smem, size = 0x4, offset = 0x4, fixed_abs, tag = 'smem constant byte address 0x4 - core index']
  #allocation1 [shape = 'u32[144,128]{1,0:T(1,128)}', space=vmem, size = 0x12000, scoped, tag = 'internal scratch']
  #allocation2 [shape = 'f32[1]{0:T(128)S(6)}', space=smem, size = 0x200, scoped, tag = 'scoped memory for tpu_custom_call.1']
  %s0 = inlined_call_operand.hbm [shape: f32[2,8,32], index: 0, kind: input, shape index: {}]
  %s1 = inlined_call_operand.vmem [shape: f32[1,1,32], index: 1, kind: input, shape index: {}]
  %s2 = inlined_call_operand.<no memory space> [shape: f32[1], index: 2, kind: input, shape index: {}]
  %s3 = inlined_call_operand.hbm [shape: f32[2,1,32], index: 3, kind: output, shape index: {}]
  %s4 = sld [smem:[#allocation0]]
  $region26: #{tpu_custom_call.1} parent=0
    _
  %s6 = ssub.s32 1, %s4
  %s7 = scalar_select 0, %s6, %s4
  %8 = sst [smem:[#allocation2]] %s2
  $region1: #{tpu_custom_call.1} parent=0
    #allocation3 [shape = 'u8[8192]{0}', space=vmem, size = 0x2000, scoped, tag = 'input window, operand 0, single buffered']
    #allocation4 [shape = 's32[1]{0}', space=sflag, size = 0x4, scoped, tag = 'scoped memory for tpu_custom_call.1']
    #allocation5 [shape = 's32[1]{0}', space=sflag, size = 0x4, scoped, tag = 'scoped memory for tpu_custom_call.1']
    #allocation6 [shape = 'u8[1024]{0}', space=vmem, size = 0x400, scoped, tag = 'output window, operand 0, single buffered']
    %9 = vsyncpa [#allocation4], 0
    %10 = vsyncpa [#allocation5], 0
    // Predicated region
    $region2: #{tpu_custom_call.1} parent=1 // pred_check
      _
    $region3: #{tpu_custom_call.1} parent=1 // pred_check_branch
      %12 = sbr.rel (0) target = $region5
    $region4: #{tpu_custom_call.1} parent=1 // pred_region
      %s14 = ssub.s32 256, 256
      %15 = vsyncadd [#allocation4], %s14
      %s16 = sshll.u32 [#allocation3], 4
      %s17 = int_to_ptr.vmem [resolvable:$true] %s16
      %22 = dma.hbm_to_vmem [thread:$0]  %s0, 256, %s17, [#allocation4], 128, 128, 8
    $region5: #{tpu_custom_call.1} parent=1 // pred_fallthru
      _
    // Predicated region
    $region6: #{tpu_custom_call.1} parent=1 // pred_check
      _
    $region7: #{tpu_custom_call.1} parent=1 // pred_check_branch
      %24 = sbr.rel (0) target = $region9
    $region8: #{tpu_custom_call.1} parent=1 // pred_region
      _
    $region9: #{tpu_custom_call.1} parent=1 // pred_fallthru
      _
    // Predicated region
    $region10: #{tpu_custom_call.1} parent=1 // pred_check
      _
    $region11: #{tpu_custom_call.1} parent=1 // pred_check_branch
      %26 = sbr.rel (0) target = $region13
    $region12: #{tpu_custom_call.1} parent=1 // pred_region
      _
    $region13: #{tpu_custom_call.1} parent=1 // pred_fallthru
      _
    // Predicated region
    $region14: #{tpu_custom_call.1} parent=1 // pred_check
      _
    $region15: #{tpu_custom_call.1} parent=1 // pred_check_branch
      %28 = sbr.rel (0) target = $region17
    $region16: #{tpu_custom_call.1} parent=1 // pred_region
      %29 = dma.done [#allocation4], 256
    $region17: #{tpu_custom_call.1} parent=1 // pred_fallthru
      _
    %v30 = vld [vmem:[#allocation3] sm:$0xff]
    %v31 = vld [vmem:[#allocation3 + $0x8] sm:$0xff]
    %v32 = vld [vmem:[%s1] sm:$0x1]
    %s33 = sld [smem:[#allocation2]]
    %v34 = vstv %s33
    %vm35 = vcmask 261120
    %v37 = vsel %vm35, %v32, 0
    %v40 = vsel %vm35, %v30, 0
    %42 = vmatprep.subr.mxu0 0.0
    %v43 = vand.u32 %v40, 4294901760
    %44 = vmatpush1.xpose.msra.mxu0 %v43
    %45 = vmatprep.subr.mxu0 0.0
    %46 = vmatpush1.xpose.msra.mxu0 0.0
    %47 = vmatprep.subr.mxu0 0.0
    %48 = vmatpush1.xpose.msra.mxu0 0.0
    %49 = vmatprep.subr.mxu0 0.0
    %50 = vmatpush1.xpose.msra.mxu0 0.0
    %51 = vmatprep.subr.mxu0 0.0
    %52 = vmatpush1.xpose.msra.mxu0 0.0
    %53 = vmatprep.subr.mxu0 0.0
    %54 = vmatpush1.xpose.msra.mxu0 0.0
    %55 = vmatprep.subr.mxu0 0.0
    %56 = vmatpush1.xpose.msra.mxu0 0.0
    %57 = vmatprep.subr.mxu0 0.0
    %58 = vmatpush1.xpose.msra.mxu0 0.0
    %59 = vmatprep.subr.mxu0 0.0
    %60 = vmatpush1.xpose.msra.mxu0 0.0
    %61 = vmatprep.subr.mxu0 0.0
    %62 = vmatpush1.xpose.msra.mxu0 0.0
    %63 = vmatprep.subr.mxu0 0.0
    %64 = vmatpush1.xpose.msra.mxu0 0.0
    %65 = vmatprep.subr.mxu0 0.0
    %66 = vmatpush1.xpose.msra.mxu0 0.0
    %67 = vmatprep.subr.mxu0 0.0
    %68 = vmatpush1.xpose.msra.mxu0 0.0
    %69 = vmatprep.subr.mxu0 0.0
    %70 = vmatpush1.xpose.msra.mxu0 0.0
    %71 = vmatprep.subr.mxu0 0.0
    %72 = vmatpush1.xpose.msra.mxu0 0.0
    %73 = vmatprep.subr.mxu0 0.0
    %74 = vmatpush1.xpose.msra.mxu0 0.0
    %75 = vmatprep.subr.mxu0 0.0
    %76 = vmatpush1.xpose.msra.mxu0 0.0
    %77 = vmatprep.subr.mxu0 0.0
    %78 = vmatpush1.xpose.msra.mxu0 0.0
    %79 = vmatprep.subr.mxu0 0.0
    %80 = vmatpush1.xpose.msra.mxu0 0.0
    %81 = vmatprep.subr.mxu0 0.0
    %82 = vmatpush1.xpose.msra.mxu0 0.0
    %83 = vmatprep.subr.mxu0 0.0
    %84 = vmatpush1.xpose.msra.mxu0 0.0
    %85 = vmatprep.subr.mxu0 0.0
    %86 = vmatpush1.xpose.msra.mxu0 0.0
    %87 = vmatprep.subr.mxu0 0.0
    %88 = vmatpush1.xpose.msra.mxu0 0.0
    %89 = vmatprep.subr.mxu0 0.0
    %90 = vmatpush1.xpose.msra.mxu0 0.0
    %91 = vmatprep.subr.mxu0 0.0
    %92 = vmatpush1.xpose.msra.mxu0 0.0
    %93 = vmatprep.subr.mxu0 0.0
    %94 = vmatpush1.xpose.msra.mxu0 0.0
    %95 = vmatprep.subr.mxu0 0.0
    %96 = vmatpush1.xpose.msra.mxu0 0.0
    %97 = vmatprep.subr.mxu0 0.0
    %98 = vmatpush1.xpose.msra.mxu0 0.0
    %99 = vmatprep.subr.mxu0 0.0
    %100 = vmatpush1.xpose.msra.mxu0 0.0
    %101 = vmatprep.subr.mxu0 0.0
    %102 = vmatpush1.xpose.msra.mxu0 0.0
    %103 = vmatprep.subr.mxu0 0.0
    %104 = vmatpush1.xpose.msra.mxu0 0.0
    %105 = vmatprep.subr.mxu0 0.0
    %106 = vmatpush1.xpose.msra.mxu0 0.0
    %107 = vmatprep.mubr.f32.mxu0 0.0
    %v108 = vand.u32 %v37, 4294901760
    %v109 = vsub.f32 %v37, %v108
    %v110 = vand.u32 %v109, 4294901760
    %v111 = vsub.f32 %v109, %v110
    %v112 = vand.u32 %v111, 4294901760
    %113 = vmatmul.mubr.f32.gmra.mrb[0].mxu0 %v112
    %v114 = vpop.f32.mrb[0].mxu0
    %v115 = vadd.f32 %v34, %v114
    %v116 = vpop.f32.mrb[0].mxu0
    %117 = vdwg.mxu0
    %118 = vmatprep.subr.mxu0 0.0
    %v119 = vand.u32 %v40, 4294901760
    %v120 = vsub.f32 %v40, %v119
    %v121 = vand.u32 %v120, 4294901760
    %v122 = vsub.f32 %v120, %v121
    %v123 = vand.u32 %v122, 4294901760
    %124 = vmatpush1.xpose.msra.mxu0 %v123
    %125 = vmatprep.subr.mxu0 0.0
    %126 = vmatpush1.xpose.msra.mxu0 0.0
    %127 = vmatprep.subr.mxu0 0.0
    %128 = vmatpush1.xpose.msra.mxu0 0.0
    %129 = vmatprep.subr.mxu0 0.0
    %130 = vmatpush1.xpose.msra.mxu0 0.0
    %131 = vmatprep.subr.mxu0 0.0
    %132 = vmatpush1.xpose.msra.mxu0 0.0
    %133 = vmatprep.subr.mxu0 0.0
    %134 = vmatpush1.xpose.msra.mxu0 0.0
    %135 = vmatprep.subr.mxu0 0.0
    %136 = vmatpush1.xpose.msra.mxu0 0.0
    %137 = vmatprep.subr.mxu0 0.0
    %138 = vmatpush1.xpose.msra.mxu0 0.0
    %139 = vmatprep.subr.mxu0 0.0
    %140 = vmatpush1.xpose.msra.mxu0 0.0
    %141 = vmatprep.subr.mxu0 0.0
    %142 = vmatpush1.xpose.msra.mxu0 0.0
    %143 = vmatprep.subr.mxu0 0.0
    %144 = vmatpush1.xpose.msra.mxu0 0.0
    %145 = vmatprep.subr.mxu0 0.0
    %146 = vmatpush1.xpose.msra.mxu0 0.0
    %147 = vmatprep.subr.mxu0 0.0
    %148 = vmatpush1.xpose.msra.mxu0 0.0
    %149 = vmatprep.subr.mxu0 0.0
    %150 = vmatpush1.xpose.msra.mxu0 0.0
    %151 = vmatprep.subr.mxu0 0.0
    %152 = vmatpush1.xpose.msra.mxu0 0.0
    %153 = vmatprep.subr.mxu0 0.0
    %154 = vmatpush1.xpose.msra.mxu0 0.0
    %155 = vmatprep.subr.mxu0 0.0
    %156 = vmatpush1.xpose.msra.mxu0 0.0
    %157 = vmatprep.subr.mxu0 0.0
    %158 = vmatpush1.xpose.msra.mxu0 0.0
    %159 = vmatprep.subr.mxu0 0.0
    %160 = vmatpush1.xpose.msra.mxu0 0.0
    %161 = vmatprep.subr.mxu0 0.0
    %162 = vmatpush1.xpose.msra.mxu0 0.0
    %163 = vmatprep.subr.mxu0 0.0
    %164 = vmatpush1.xpose.msra.mxu0 0.0
    %165 = vmatprep.subr.mxu0 0.0
    %166 = vmatpush1.xpose.msra.mxu0 0.0
    %167 = vmatprep.subr.mxu0 0.0
    %168 = vmatpush1.xpose.msra.mxu0 0.0
    %169 = vmatprep.subr.mxu0 0.0
    %170 = vmatpush1.xpose.msra.mxu0 0.0
    %171 = vmatprep.subr.mxu0 0.0
    %172 = vmatpush1.xpose.msra.mxu0 0.0
    %173 = vmatprep.subr.mxu0 0.0
    %174 = vmatpush1.xpose.msra.mxu0 0.0
    %175 = vmatprep.subr.mxu0 0.0
    %176 = vmatpush1.xpose.msra.mxu0 0.0
    %177 = vmatprep.subr.mxu0 0.0
    %178 = vmatpush1.xpose.msra.mxu0 0.0
    %179 = vmatprep.subr.mxu0 0.0
    %180 = vmatpush1.xpose.msra.mxu0 0.0
    %181 = vmatprep.subr.mxu0 0.0
    %182 = vmatpush1.xpose.msra.mxu0 0.0
    %183 = vmatprep.subr.mxu0 0.0
    %184 = vmatpush1.xpose.msra.mxu0 0.0
    %185 = vmatprep.subr.mxu0 0.0
    %186 = vmatpush1.xpose.msra.mxu0 0.0
    %187 = vmatprep.mubr.f32.mxu0 0.0
    %v188 = vand.u32 %v37, 4294901760
    %189 = vmatmul.mubr.f32.gmra.mrb[0].mxu0 %v188
    %v190 = vpop.f32.mrb[0].mxu0
    %v191 = vadd.f32 %v115, %v190
    %v192 = vpop.f32.mrb[0].mxu0
    %193 = vdwg.mxu0
    %194 = vmatprep.subr.mxu0 0.0
    %v195 = vand.u32 %v40, 4294901760
    %v196 = vsub.f32 %v40, %v195
    %197 = vmatpush1.xpose.msra.mxu0 %v196
    %198 = vmatprep.subr.mxu0 0.0
    %199 = vmatpush1.xpose.msra.mxu0 0.0
    %200 = vmatprep.subr.mxu0 0.0
    %201 = vmatpush1.xpose.msra.mxu0 0.0
    %202 = vmatprep.subr.mxu0 0.0
    %203 = vmatpush1.xpose.msra.mxu0 0.0
    %204 = vmatprep.subr.mxu0 0.0
    %205 = vmatpush1.xpose.msra.mxu0 0.0
    %206 = vmatprep.subr.mxu0 0.0
    %207 = vmatpush1.xpose.msra.mxu0 0.0
    %208 = vmatprep.subr.mxu0 0.0
    %209 = vmatpush1.xpose.msra.mxu0 0.0
    %210 = vmatprep.subr.mxu0 0.0
    %211 = vmatpush1.xpose.msra.mxu0 0.0
    %212 = vmatprep.subr.mxu0 0.0
    %213 = vmatpush1.xpose.msra.mxu0 0.0
    %214 = vmatprep.subr.mxu0 0.0
    %215 = vmatpush1.xpose.msra.mxu0 0.0
    %216 = vmatprep.subr.mxu0 0.0
    %217 = vmatpush1.xpose.msra.mxu0 0.0
    %218 = vmatprep.subr.mxu0 0.0
    %219 = vmatpush1.xpose.msra.mxu0 0.0
    %220 = vmatprep.subr.mxu0 0.0
    %221 = vmatpush1.xpose.msra.mxu0 0.0
    %222 = vmatprep.subr.mxu0 0.0
    %223 = vmatpush1.xpose.msra.mxu0 0.0
    %224 = vmatprep.subr.mxu0 0.0
    %225 = vmatpush1.xpose.msra.mxu0 0.0
    %226 = vmatprep.subr.mxu0 0.0
    %227 = vmatpush1.xpose.msra.mxu0 0.0
    %228 = vmatprep.subr.mxu0 0.0
    %229 = vmatpush1.xpose.msra.mxu0 0.0
    %230 = vmatprep.subr.mxu0 0.0
    %231 = vmatpush1.xpose.msra.mxu0 0.0
    %232 = vmatprep.subr.mxu0 0.0
    %233 = vmatpush1.xpose.msra.mxu0 0.0
    %234 = vmatprep.subr.mxu0 0.0
    %235 = vmatpush1.xpose.msra.mxu0 0.0
    %236 = vmatprep.subr.mxu0 0.0
    %237 = vmatpush1.xpose.msra.mxu0 0.0
    %238 = vmatprep.subr.mxu0 0.0
    %239 = vmatpush1.xpose.msra.mxu0 0.0
    %240 = vmatprep.subr.mxu0 0.0
    %241 = vmatpush1.xpose.msra.mxu0 0.0
    %242 = vmatprep.subr.mxu0 0.0
    %243 = vmatpush1.xpose.msra.mxu0 0.0
    %244 = vmatprep.subr.mxu0 0.0
    %245 = vmatpush1.xpose.msra.mxu0 0.0
    %246 = vmatprep.subr.mxu0 0.0
    %247 = vmatpush1.xpose.msra.mxu0 0.0
    %248 = vmatprep.subr.mxu0 0.0
    %249 = vmatpush1.xpose.msra.mxu0 0.0
    %250 = vmatprep.subr.mxu0 0.0
    %251 = vmatpush1.xpose.msra.mxu0 0.0
    %252 = vmatprep.subr.mxu0 0.0
    %253 = vmatpush1.xpose.msra.mxu0 0.0
    %254 = vmatprep.subr.mxu0 0.0
    %255 = vmatpush1.xpose.msra.mxu0 0.0
    %256 = vmatprep.subr.mxu0 0.0
    %257 = vmatpush1.xpose.msra.mxu0 0.0
    %258 = vmatprep.subr.mxu0 0.0
    %259 = vmatpush1.xpose.msra.mxu0 0.0
    %260 = vmatprep.mubr.f32.mxu0 0.0
    %v261 = vand.u32 %v37, 4294901760
    %v262 = vsub.f32 %v37, %v261
    %263 = vmatmul.mubr.f32.gmra.mrb[0].mxu0 %v262
    %v264 = vpop.f32.mrb[0].mxu0
    %v265 = vadd.f32 %v191, %v264
    %v266 = vpop.f32.mrb[0].mxu0
    %267 = vdwg.mxu0
    %268 = vmatprep.subr.mxu0 0.0
    %v269 = vand.u32 %v40, 4294901760
    %270 = vmatpush1.xpose.msra.mxu0 %v269
    %271 = vmatprep.subr.mxu0 0.0
    %272 = vmatpush1.xpose.msra.mxu0 0.0
    %273 = vmatprep.subr.mxu0 0.0
    %274 = vmatpush1.xpose.msra.mxu0 0.0
    %275 = vmatprep.subr.mxu0 0.0
    %276 = vmatpush1.xpose.msra.mxu0 0.0
    %277 = vmatprep.subr.mxu0 0.0
    %278 = vmatpush1.xpose.msra.mxu0 0.0
    %279 = vmatprep.subr.mxu0 0.0
    %280 = vmatpush1.xpose.msra.mxu0 0.0
    %281 = vmatprep.subr.mxu0 0.0
    %282 = vmatpush1.xpose.msra.mxu0 0.0
    %283 = vmatprep.subr.mxu0 0.0
    %284 = vmatpush1.xpose.msra.mxu0 0.0
    %285 = vmatprep.subr.mxu0 0.0
    %286 = vmatpush1.xpose.msra.mxu0 0.0
    %287 = vmatprep.subr.mxu0 0.0
    %288 = vmatpush1.xpose.msra.mxu0 0.0
    %289 = vmatprep.subr.mxu0 0.0
    %290 = vmatpush1.xpose.msra.mxu0 0.0
    %291 = vmatprep.subr.mxu0 0.0
    %292 = vmatpush1.xpose.msra.mxu0 0.0
    %293 = vmatprep.subr.mxu0 0.0
    %294 = vmatpush1.xpose.msra.mxu0 0.0
    %295 = vmatprep.subr.mxu0 0.0
    %296 = vmatpush1.xpose.msra.mxu0 0.0
    %297 = vmatprep.subr.mxu0 0.0
    %298 = vmatpush1.xpose.msra.mxu0 0.0
    %299 = vmatprep.subr.mxu0 0.0
    %300 = vmatpush1.xpose.msra.mxu0 0.0
    %301 = vmatprep.subr.mxu0 0.0
    %302 = vmatpush1.xpose.msra.mxu0 0.0
    %303 = vmatprep.subr.mxu0 0.0
    %304 = vmatpush1.xpose.msra.mxu0 0.0
    %305 = vmatprep.subr.mxu0 0.0
    %306 = vmatpush1.xpose.msra.mxu0 0.0
    %307 = vmatprep.subr.mxu0 0.0
    %308 = vmatpush1.xpose.msra.mxu0 0.0
    %309 = vmatprep.subr.mxu0 0.0
    %310 = vmatpush1.xpose.msra.mxu0 0.0
    %311 = vmatprep.subr.mxu0 0.0
    %312 = vmatpush1.xpose.msra.mxu0 0.0
    %313 = vmatprep.subr.mxu0 0.0
    %314 = vmatpush1.xpose.msra.mxu0 0.0
    %315 = vmatprep.subr.mxu0 0.0
    %316 = vmatpush1.xpose.msra.mxu0 0.0
    %317 = vmatprep.subr.mxu0 0.0
    %318 = vmatpush1.xpose.msra.mxu0 0.0
    %319 = vmatprep.subr.mxu0 0.0
    %320 = vmatpush1.xpose.msra.mxu0 0.0
    %321 = vmatprep.subr.mxu0 0.0
    %322 = vmatpush1.xpose.msra.mxu0 0.0
    %323 = vmatprep.subr.mxu0 0.0
    %324 = vmatpush1.xpose.msra.mxu0 0.0
    %325 = vmatprep.subr.mxu0 0.0
    %326 = vmatpush1.xpose.msra.mxu0 0.0
    %327 = vmatprep.subr.mxu0 0.0
    %328 = vmatpush1.xpose.msra.mxu0 0.0
    %329 = vmatprep.subr.mxu0 0.0
    %330 = vmatpush1.xpose.msra.mxu0 0.0
    %331 = vmatprep.subr.mxu0 0.0
    %332 = vmatpush1.xpose.msra.mxu0 0.0
    %333 = vmatprep.mubr.f32.mxu0 0.0
    %v334 = vand.u32 %v37, 4294901760
    %v335 = vsub.f32 %v37, %v334
    %v336 = vand.u32 %v335, 4294901760
    %337 = vmatmul.mubr.f32.gmra.mrb[0].mxu0 %v336
    %v338 = vpop.f32.mrb[0].mxu0
    %v339 = vadd.f32 %v265, %v338
    %v340 = vpop.f32.mrb[0].mxu0
    %341 = vdwg.mxu0
    %342 = vmatprep.subr.mxu0 0.0
    %v343 = vand.u32 %v40, 4294901760
    %v344 = vsub.f32 %v40, %v343
    %v345 = vand.u32 %v344, 4294901760
    %346 = vmatpush1.xpose.msra.mxu0 %v345
    %347 = vmatprep.subr.mxu0 0.0
    %348 = vmatpush1.xpose.msra.mxu0 0.0
    %349 = vmatprep.subr.mxu0 0.0
    %350 = vmatpush1.xpose.msra.mxu0 0.0
    %351 = vmatprep.subr.mxu0 0.0
    %352 = vmatpush1.xpose.msra.mxu0 0.0
    %353 = vmatprep.subr.mxu0 0.0
    %354 = vmatpush1.xpose.msra.mxu0 0.0
    %355 = vmatprep.subr.mxu0 0.0
    %356 = vmatpush1.xpose.msra.mxu0 0.0
    %357 = vmatprep.subr.mxu0 0.0
    %358 = vmatpush1.xpose.msra.mxu0 0.0
    %359 = vmatprep.subr.mxu0 0.0
    %360 = vmatpush1.xpose.msra.mxu0 0.0
    %361 = vmatprep.subr.mxu0 0.0
    %362 = vmatpush1.xpose.msra.mxu0 0.0
    %363 = vmatprep.subr.mxu0 0.0
    %364 = vmatpush1.xpose.msra.mxu0 0.0
    %365 = vmatprep.subr.mxu0 0.0
    %366 = vmatpush1.xpose.msra.mxu0 0.0
    %367 = vmatprep.subr.mxu0 0.0
    %368 = vmatpush1.xpose.msra.mxu0 0.0
    %369 = vmatprep.subr.mxu0 0.0
    %370 = vmatpush1.xpose.msra.mxu0 0.0
    %371 = vmatprep.subr.mxu0 0.0
    %372 = vmatpush1.xpose.msra.mxu0 0.0
    %373 = vmatprep.subr.mxu0 0.0
    %374 = vmatpush1.xpose.msra.mxu0 0.0
    %375 = vmatprep.subr.mxu0 0.0
    %376 = vmatpush1.xpose.msra.mxu0 0.0
    %377 = vmatprep.subr.mxu0 0.0
    %378 = vmatpush1.xpose.msra.mxu0 0.0
    %379 = vmatprep.subr.mxu0 0.0
    %380 = vmatpush1.xpose.msra.mxu0 0.0
    %381 = vmatprep.subr.mxu0 0.0
    %382 = vmatpush1.xpose.msra.mxu0 0.0
    %383 = vmatprep.subr.mxu0 0.0
    %384 = vmatpush1.xpose.msra.mxu0 0.0
    %385 = vmatprep.subr.mxu0 0.0
    %386 = vmatpush1.xpose.msra.mxu0 0.0
    %387 = vmatprep.subr.mxu0 0.0
    %388 = vmatpush1.xpose.msra.mxu0 0.0
    %389 = vmatprep.subr.mxu0 0.0
    %390 = vmatpush1.xpose.msra.mxu0 0.0
    %391 = vmatprep.subr.mxu0 0.0
    %392 = vmatpush1.xpose.msra.mxu0 0.0
    %393 = vmatprep.subr.mxu0 0.0
    %394 = vmatpush1.xpose.msra.mxu0 0.0
    %395 = vmatprep.subr.mxu0 0.0
    %396 = vmatpush1.xpose.msra.mxu0 0.0
    %397 = vmatprep.subr.mxu0 0.0
    %398 = vmatpush1.xpose.msra.mxu0 0.0
    %399 = vmatprep.subr.mxu0 0.0
    %400 = vmatpush1.xpose.msra.mxu0 0.0
    %401 = vmatprep.subr.mxu0 0.0
    %402 = vmatpush1.xpose.msra.mxu0 0.0
    %403 = vmatprep.subr.mxu0 0.0
    %404 = vmatpush1.xpose.msra.mxu0 0.0
    %405 = vmatprep.subr.mxu0 0.0
    %406 = vmatpush1.xpose.msra.mxu0 0.0
    %407 = vmatprep.subr.mxu0 0.0
    %408 = vmatpush1.xpose.msra.mxu0 0.0
    %409 = vmatprep.mubr.f32.mxu0 0.0
    %v410 = vand.u32 %v37, 4294901760
    %411 = vmatmul.mubr.f32.gmra.mrb[0].mxu0 %v410
    %v412 = vpop.f32.mrb[0].mxu0
    %v413 = vadd.f32 %v339, %v412
    %v414 = vpop.f32.mrb[0].mxu0
    %415 = vdwg.mxu0
    %416 = vmatprep.subr.mxu0 0.0
    %v417 = vand.u32 %v40, 4294901760
    %418 = vmatpush1.xpose.msra.mxu0 %v417
    %419 = vmatprep.subr.mxu0 0.0
    %420 = vmatpush1.xpose.msra.mxu0 0.0
    %421 = vmatprep.subr.mxu0 0.0
    %422 = vmatpush1.xpose.msra.mxu0 0.0
    %423 = vmatprep.subr.mxu0 0.0
    %424 = vmatpush1.xpose.msra.mxu0 0.0
    %425 = vmatprep.subr.mxu0 0.0
    %426 = vmatpush1.xpose.msra.mxu0 0.0
    %427 = vmatprep.subr.mxu0 0.0
    %428 = vmatpush1.xpose.msra.mxu0 0.0
    %429 = vmatprep.subr.mxu0 0.0
    %430 = vmatpush1.xpose.msra.mxu0 0.0
    %431 = vmatprep.subr.mxu0 0.0
    %432 = vmatpush1.xpose.msra.mxu0 0.0
    %433 = vmatprep.subr.mxu0 0.0
    %434 = vmatpush1.xpose.msra.mxu0 0.0
    %435 = vmatprep.subr.mxu0 0.0
    %436 = vmatpush1.xpose.msra.mxu0 0.0
    %437 = vmatprep.subr.mxu0 0.0
    %438 = vmatpush1.xpose.msra.mxu0 0.0
    %439 = vmatprep.subr.mxu0 0.0
    %440 = vmatpush1.xpose.msra.mxu0 0.0
    %441 = vmatprep.subr.mxu0 0.0
    %442 = vmatpush1.xpose.msra.mxu0 0.0
    %443 = vmatprep.subr.mxu0 0.0
    %444 = vmatpush1.xpose.msra.mxu0 0.0
    %445 = vmatprep.subr.mxu0 0.0
    %446 = vmatpush1.xpose.msra.mxu0 0.0
    %447 = vmatprep.subr.mxu0 0.0
    %448 = vmatpush1.xpose.msra.mxu0 0.0
    %449 = vmatprep.subr.mxu0 0.0
    %450 = vmatpush1.xpose.msra.mxu0 0.0
    %451 = vmatprep.subr.mxu0 0.0
    %452 = vmatpush1.xpose.msra.mxu0 0.0
    %453 = vmatprep.subr.mxu0 0.0
    %454 = vmatpush1.xpose.msra.mxu0 0.0
    %455 = vmatprep.subr.mxu0 0.0
    %456 = vmatpush1.xpose.msra.mxu0 0.0
    %457 = vmatprep.subr.mxu0 0.0
    %458 = vmatpush1.xpose.msra.mxu0 0.0
    %459 = vmatprep.subr.mxu0 0.0
    %460 = vmatpush1.xpose.msra.mxu0 0.0
    %461 = vmatprep.subr.mxu0 0.0
    %462 = vmatpush1.xpose.msra.mxu0 0.0
    %463 = vmatprep.subr.mxu0 0.0
    %464 = vmatpush1.xpose.msra.mxu0 0.0
    %465 = vmatprep.subr.mxu0 0.0
    %466 = vmatpush1.xpose.msra.mxu0 0.0
    %467 = vmatprep.subr.mxu0 0.0
    %468 = vmatpush1.xpose.msra.mxu0 0.0
    %469 = vmatprep.subr.mxu0 0.0
    %470 = vmatpush1.xpose.msra.mxu0 0.0
    %471 = vmatprep.subr.mxu0 0.0
    %472 = vmatpush1.xpose.msra.mxu0 0.0
    %473 = vmatprep.subr.mxu0 0.0
    %474 = vmatpush1.xpose.msra.mxu0 0.0
    %475 = vmatprep.subr.mxu0 0.0
    %476 = vmatpush1.xpose.msra.mxu0 0.0
    %477 = vmatprep.subr.mxu0 0.0
    %478 = vmatpush1.xpose.msra.mxu0 0.0
    %479 = vmatprep.subr.mxu0 0.0
    %480 = vmatpush1.xpose.msra.mxu0 0.0
    %481 = vmatprep.mubr.f32.mxu0 0.0
    %v482 = vand.u32 %v37, 4294901760
    %483 = vmatmul.mubr.f32.gmra.mrb[0].mxu0 %v482
    %v484 = vpop.f32.mrb[0].mxu0
    %v485 = vadd.f32 %v413, %v484
    %v486 = vpop.f32.mrb[0].mxu0
    %487 = vdwg.mxu0
    %v489 = vsel %vm35, %v31, 0
    %491 = vmatprep.subr.mxu0 0.0
    %v492 = vand.u32 %v489, 4294901760
    %493 = vmatpush1.xpose.msra.mxu0 %v492
    %494 = vmatprep.subr.mxu0 0.0
    %495 = vmatpush1.xpose.msra.mxu0 0.0
    %496 = vmatprep.subr.mxu0 0.0
    %497 = vmatpush1.xpose.msra.mxu0 0.0
    %498 = vmatprep.subr.mxu0 0.0
    %499 = vmatpush1.xpose.msra.mxu0 0.0
    %500 = vmatprep.subr.mxu0 0.0
    %501 = vmatpush1.xpose.msra.mxu0 0.0
    %502 = vmatprep.subr.mxu0 0.0
    %503 = vmatpush1.xpose.msra.mxu0 0.0
    %504 = vmatprep.subr.mxu0 0.0
    %505 = vmatpush1.xpose.msra.mxu0 0.0
    %506 = vmatprep.subr.mxu0 0.0
    %507 = vmatpush1.xpose.msra.mxu0 0.0
    %508 = vmatprep.subr.mxu0 0.0
    %509 = vmatpush1.xpose.msra.mxu0 0.0
    %510 = vmatprep.subr.mxu0 0.0
    %511 = vmatpush1.xpose.msra.mxu0 0.0
    %512 = vmatprep.subr.mxu0 0.0
    %513 = vmatpush1.xpose.msra.mxu0 0.0
    %514 = vmatprep.subr.mxu0 0.0
    %515 = vmatpush1.xpose.msra.mxu0 0.0
    %516 = vmatprep.subr.mxu0 0.0
    %517 = vmatpush1.xpose.msra.mxu0 0.0
    %518 = vmatprep.subr.mxu0 0.0
    %519 = vmatpush1.xpose.msra.mxu0 0.0
    %520 = vmatprep.subr.mxu0 0.0
    %521 = vmatpush1.xpose.msra.mxu0 0.0
    %522 = vmatprep.subr.mxu0 0.0
    %523 = vmatpush1.xpose.msra.mxu0 0.0
    %524 = vmatprep.subr.mxu0 0.0
    %525 = vmatpush1.xpose.msra.mxu0 0.0
    %526 = vmatprep.subr.mxu0 0.0
    %527 = vmatpush1.xpose.msra.mxu0 0.0
    %528 = vmatprep.subr.mxu0 0.0
    %529 = vmatpush1.xpose.msra.mxu0 0.0
    %530 = vmatprep.subr.mxu0 0.0
    %531 = vmatpush1.xpose.msra.mxu0 0.0
    %532 = vmatprep.subr.mxu0 0.0
    %533 = vmatpush1.xpose.msra.mxu0 0.0
    %534 = vmatprep.subr.mxu0 0.0
    %535 = vmatpush1.xpose.msra.mxu0 0.0
    %536 = vmatprep.subr.mxu0 0.0
    %537 = vmatpush1.xpose.msra.mxu0 0.0
    %538 = vmatprep.subr.mxu0 0.0
    %539 = vmatpush1.xpose.msra.mxu0 0.0
    %540 = vmatprep.subr.mxu0 0.0
    %541 = vmatpush1.xpose.msra.mxu0 0.0
    %542 = vmatprep.subr.mxu0 0.0
    %543 = vmatpush1.xpose.msra.mxu0 0.0
    %544 = vmatprep.subr.mxu0 0.0
    %545 = vmatpush1.xpose.msra.mxu0 0.0
    %546 = vmatprep.subr.mxu0 0.0
    %547 = vmatpush1.xpose.msra.mxu0 0.0
    %548 = vmatprep.subr.mxu0 0.0
    %549 = vmatpush1.xpose.msra.mxu0 0.0
    %550 = vmatprep.subr.mxu0 0.0
    %551 = vmatpush1.xpose.msra.mxu0 0.0
    %552 = vmatprep.subr.mxu0 0.0
    %553 = vmatpush1.xpose.msra.mxu0 0.0
    %554 = vmatprep.subr.mxu0 0.0
    %555 = vmatpush1.xpose.msra.mxu0 0.0
    %556 = vmatprep.mubr.f32.mxu0 0.0
    %v557 = vand.u32 %v37, 4294901760
    %v558 = vsub.f32 %v37, %v557
    %v559 = vand.u32 %v558, 4294901760
    %v560 = vsub.f32 %v558, %v559
    %v561 = vand.u32 %v560, 4294901760
    %562 = vmatmul.mubr.f32.gmra.mrb[0].mxu0 %v561
    %v563 = vpop.f32.mrb[0].mxu0
    %v564 = vadd.f32 %v34, %v563
    %v565 = vpop.f32.mrb[0].mxu0
    %566 = vdwg.mxu0
    %567 = vmatprep.subr.mxu0 0.0
    %v568 = vand.u32 %v489, 4294901760
    %v569 = vsub.f32 %v489, %v568
    %v570 = vand.u32 %v569, 4294901760
    %v571 = vsub.f32 %v569, %v570
    %v572 = vand.u32 %v571, 4294901760
    %573 = vmatpush1.xpose.msra.mxu0 %v572
    %574 = vmatprep.subr.mxu0 0.0
    %575 = vmatpush1.xpose.msra.mxu0 0.0
    %576 = vmatprep.subr.mxu0 0.0
    %577 = vmatpush1.xpose.msra.mxu0 0.0
    %578 = vmatprep.subr.mxu0 0.0
    %579 = vmatpush1.xpose.msra.mxu0 0.0
    %580 = vmatprep.subr.mxu0 0.0
    %581 = vmatpush1.xpose.msra.mxu0 0.0
    %582 = vmatprep.subr.mxu0 0.0
    %583 = vmatpush1.xpose.msra.mxu0 0.0
    %584 = vmatprep.subr.mxu0 0.0
    %585 = vmatpush1.xpose.msra.mxu0 0.0
    %586 = vmatprep.subr.mxu0 0.0
    %587 = vmatpush1.xpose.msra.mxu0 0.0
    %588 = vmatprep.subr.mxu0 0.0
    %589 = vmatpush1.xpose.msra.mxu0 0.0
    %590 = vmatprep.subr.mxu0 0.0
    %591 = vmatpush1.xpose.msra.mxu0 0.0
    %592 = vmatprep.subr.mxu0 0.0
    %593 = vmatpush1.xpose.msra.mxu0 0.0
    %594 = vmatprep.subr.mxu0 0.0
    %595 = vmatpush1.xpose.msra.mxu0 0.0
    %596 = vmatprep.subr.mxu0 0.0
    %597 = vmatpush1.xpose.msra.mxu0 0.0
    %598 = vmatprep.subr.mxu0 0.0
    %599 = vmatpush1.xpose.msra.mxu0 0.0
    %600 = vmatprep.subr.mxu0 0.0
    %601 = vmatpush1.xpose.msra.mxu0 0.0
    %602 = vmatprep.subr.mxu0 0.0
    %603 = vmatpush1.xpose.msra.mxu0 0.0
    %604 = vmatprep.subr.mxu0 0.0
    %605 = vmatpush1.xpose.msra.mxu0 0.0
    %606 = vmatprep.subr.mxu0 0.0
    %607 = vmatpush1.xpose.msra.mxu0 0.0
    %608 = vmatprep.subr.mxu0 0.0
    %609 = vmatpush1.xpose.msra.mxu0 0.0
    %610 = vmatprep.subr.mxu0 0.0
    %611 = vmatpush1.xpose.msra.mxu0 0.0
    %612 = vmatprep.subr.mxu0 0.0
    %613 = vmatpush1.xpose.msra.mxu0 0.0
    %614 = vmatprep.subr.mxu0 0.0
    %615 = vmatpush1.xpose.msra.mxu0 0.0
    %616 = vmatprep.subr.mxu0 0.0
    %617 = vmatpush1.xpose.msra.mxu0 0.0
    %618 = vmatprep.subr.mxu0 0.0
    %619 = vmatpush1.xpose.msra.mxu0 0.0
    %620 = vmatprep.subr.mxu0 0.0
    %621 = vmatpush1.xpose.msra.mxu0 0.0
    %622 = vmatprep.subr.mxu0 0.0
    %623 = vmatpush1.xpose.msra.mxu0 0.0
    %624 = vmatprep.subr.mxu0 0.0
    %625 = vmatpush1.xpose.msra.mxu0 0.0
    %626 = vmatprep.subr.mxu0 0.0
    %627 = vmatpush1.xpose.msra.mxu0 0.0
    %628 = vmatprep.subr.mxu0 0.0
    %629 = vmatpush1.xpose.msra.mxu0 0.0
    %630 = vmatprep.subr.mxu0 0.0
    %631 = vmatpush1.xpose.msra.mxu0 0.0
    %632 = vmatprep.subr.mxu0 0.0
    %633 = vmatpush1.xpose.msra.mxu0 0.0
    %634 = vmatprep.subr.mxu0 0.0
    %635 = vmatpush1.xpose.msra.mxu0 0.0
    %636 = vmatprep.mubr.f32.mxu0 0.0
    %v637 = vand.u32 %v37, 4294901760
    %638 = vmatmul.mubr.f32.gmra.mrb[0].mxu0 %v637
    %v639 = vpop.f32.mrb[0].mxu0
    %v640 = vadd.f32 %v564, %v639
    %v641 = vpop.f32.mrb[0].mxu0
    %642 = vdwg.mxu0
    %643 = vmatprep.subr.mxu0 0.0
    %v644 = vand.u32 %v489, 4294901760
    %v645 = vsub.f32 %v489, %v644
    %646 = vmatpush1.xpose.msra.mxu0 %v645
    %647 = vmatprep.subr.mxu0 0.0
    %648 = vmatpush1.xpose.msra.mxu0 0.0
    %649 = vmatprep.subr.mxu0 0.0
    %650 = vmatpush1.xpose.msra.mxu0 0.0
    %651 = vmatprep.subr.mxu0 0.0
    %652 = vmatpush1.xpose.msra.mxu0 0.0
    %653 = vmatprep.subr.mxu0 0.0
    %654 = vmatpush1.xpose.msra.mxu0 0.0
    %655 = vmatprep.subr.mxu0 0.0
    %656 = vmatpush1.xpose.msra.mxu0 0.0
    %657 = vmatprep.subr.mxu0 0.0
    %658 = vmatpush1.xpose.msra.mxu0 0.0
    %659 = vmatprep.subr.mxu0 0.0
    %660 = vmatpush1.xpose.msra.mxu0 0.0
    %661 = vmatprep.subr.mxu0 0.0
    %662 = vmatpush1.xpose.msra.mxu0 0.0
    %663 = vmatprep.subr.mxu0 0.0
    %664 = vmatpush1.xpose.msra.mxu0 0.0
    %665 = vmatprep.subr.mxu0 0.0
    %666 = vmatpush1.xpose.msra.mxu0 0.0
    %667 = vmatprep.subr.mxu0 0.0
    %668 = vmatpush1.xpose.msra.mxu0 0.0
    %669 = vmatprep.subr.mxu0 0.0
    %670 = vmatpush1.xpose.msra.mxu0 0.0
    %671 = vmatprep.subr.mxu0 0.0
    %672 = vmatpush1.xpose.msra.mxu0 0.0
    %673 = vmatprep.subr.mxu0 0.0
    %674 = vmatpush1.xpose.msra.mxu0 0.0
    %675 = vmatprep.subr.mxu0 0.0
    %676 = vmatpush1.xpose.msra.mxu0 0.0
    %677 = vmatprep.subr.mxu0 0.0
    %678 = vmatpush1.xpose.msra.mxu0 0.0
    %679 = vmatprep.subr.mxu0 0.0
    %680 = vmatpush1.xpose.msra.mxu0 0.0
    %681 = vmatprep.subr.mxu0 0.0
    %682 = vmatpush1.xpose.msra.mxu0 0.0
    %683 = vmatprep.subr.mxu0 0.0
    %684 = vmatpush1.xpose.msra.mxu0 0.0
    %685 = vmatprep.subr.mxu0 0.0
    %686 = vmatpush1.xpose.msra.mxu0 0.0
    %687 = vmatprep.subr.mxu0 0.0
    %688 = vmatpush1.xpose.msra.mxu0 0.0
    %689 = vmatprep.subr.mxu0 0.0
    %690 = vmatpush1.xpose.msra.mxu0 0.0
    %691 = vmatprep.subr.mxu0 0.0
    %692 = vmatpush1.xpose.msra.mxu0 0.0
    %693 = vmatprep.subr.mxu0 0.0
    %694 = vmatpush1.xpose.msra.mxu0 0.0
    %695 = vmatprep.subr.mxu0 0.0
    %696 = vmatpush1.xpose.msra.mxu0 0.0
    %697 = vmatprep.subr.mxu0 0.0
    %698 = vmatpush1.xpose.msra.mxu0 0.0
    %699 = vmatprep.subr.mxu0 0.0
    %700 = vmatpush1.xpose.msra.mxu0 0.0
    %701 = vmatprep.subr.mxu0 0.0
    %702 = vmatpush1.xpose.msra.mxu0 0.0
    %703 = vmatprep.subr.mxu0 0.0
    %704 = vmatpush1.xpose.msra.mxu0 0.0
    %705 = vmatprep.subr.mxu0 0.0
    %706 = vmatpush1.xpose.msra.mxu0 0.0
    %707 = vmatprep.subr.mxu0 0.0
    %708 = vmatpush1.xpose.msra.mxu0 0.0
    %709 = vmatprep.mubr.f32.mxu0 0.0
    %v710 = vand.u32 %v37, 4294901760
    %v711 = vsub.f32 %v37, %v710
    %712 = vmatmul.mubr.f32.gmra.mrb[0].mxu0 %v711
    %v713 = vpop.f32.mrb[0].mxu0
    %v714 = vadd.f32 %v640, %v713
    %v715 = vpop.f32.mrb[0].mxu0
    %716 = vdwg.mxu0
    %717 = vmatprep.subr.mxu0 0.0
    %v718 = vand.u32 %v489, 4294901760
    %719 = vmatpush1.xpose.msra.mxu0 %v718
    %720 = vmatprep.subr.mxu0 0.0
    %721 = vmatpush1.xpose.msra.mxu0 0.0
    %722 = vmatprep.subr.mxu0 0.0
    %723 = vmatpush1.xpose.msra.mxu0 0.0
    %724 = vmatprep.subr.mxu0 0.0
    %725 = vmatpush1.xpose.msra.mxu0 0.0
    %726 = vmatprep.subr.mxu0 0.0
    %727 = vmatpush1.xpose.msra.mxu0 0.0
    %728 = vmatprep.subr.mxu0 0.0
    %729 = vmatpush1.xpose.msra.mxu0 0.0
    %730 = vmatprep.subr.mxu0 0.0
    %731 = vmatpush1.xpose.msra.mxu0 0.0
    %732 = vmatprep.subr.mxu0 0.0
    %733 = vmatpush1.xpose.msra.mxu0 0.0
    %734 = vmatprep.subr.mxu0 0.0
    %735 = vmatpush1.xpose.msra.mxu0 0.0
    %736 = vmatprep.subr.mxu0 0.0
    %737 = vmatpush1.xpose.msra.mxu0 0.0
    %738 = vmatprep.subr.mxu0 0.0
    %739 = vmatpush1.xpose.msra.mxu0 0.0
    %740 = vmatprep.subr.mxu0 0.0
    %741 = vmatpush1.xpose.msra.mxu0 0.0
    %742 = vmatprep.subr.mxu0 0.0
    %743 = vmatpush1.xpose.msra.mxu0 0.0
    %744 = vmatprep.subr.mxu0 0.0
    %745 = vmatpush1.xpose.msra.mxu0 0.0
    %746 = vmatprep.subr.mxu0 0.0
    %747 = vmatpush1.xpose.msra.mxu0 0.0
    %748 = vmatprep.subr.mxu0 0.0
    %749 = vmatpush1.xpose.msra.mxu0 0.0
    %750 = vmatprep.subr.mxu0 0.0
    %751 = vmatpush1.xpose.msra.mxu0 0.0
    %752 = vmatprep.subr.mxu0 0.0
    %753 = vmatpush1.xpose.msra.mxu0 0.0
    %754 = vmatprep.subr.mxu0 0.0
    %755 = vmatpush1.xpose.msra.mxu0 0.0
    %756 = vmatprep.subr.mxu0 0.0
    %757 = vmatpush1.xpose.msra.mxu0 0.0
    %758 = vmatprep.subr.mxu0 0.0
    %759 = vmatpush1.xpose.msra.mxu0 0.0
    %760 = vmatprep.subr.mxu0 0.0
    %761 = vmatpush1.xpose.msra.mxu0 0.0
    %762 = vmatprep.subr.mxu0 0.0
    %763 = vmatpush1.xpose.msra.mxu0 0.0
    %764 = vmatprep.subr.mxu0 0.0
    %765 = vmatpush1.xpose.msra.mxu0 0.0
    %766 = vmatprep.subr.mxu0 0.0
    %767 = vmatpush1.xpose.msra.mxu0 0.0
    %768 = vmatprep.subr.mxu0 0.0
    %769 = vmatpush1.xpose.msra.mxu0 0.0
    %770 = vmatprep.subr.mxu0 0.0
    %771 = vmatpush1.xpose.msra.mxu0 0.0
    %772 = vmatprep.subr.mxu0 0.0
    %773 = vmatpush1.xpose.msra.mxu0 0.0
    %774 = vmatprep.subr.mxu0 0.0
    %775 = vmatpush1.xpose.msra.mxu0 0.0
    %776 = vmatprep.subr.mxu0 0.0
    %777 = vmatpush1.xpose.msra.mxu0 0.0
    %778 = vmatprep.subr.mxu0 0.0
    %779 = vmatpush1.xpose.msra.mxu0 0.0
    %780 = vmatprep.subr.mxu0 0.0
    %781 = vmatpush1.xpose.msra.mxu0 0.0
    %782 = vmatprep.mubr.f32.mxu0 0.0
    %v783 = vand.u32 %v37, 4294901760
    %v784 = vsub.f32 %v37, %v783
    %v785 = vand.u32 %v784, 4294901760
    %786 = vmatmul.mubr.f32.gmra.mrb[0].mxu0 %v785
    %v787 = vpop.f32.mrb[0].mxu0
    %v788 = vadd.f32 %v714, %v787
    %v789 = vpop.f32.mrb[0].mxu0
    %790 = vdwg.mxu0
    %791 = vmatprep.subr.mxu0 0.0
    %v792 = vand.u32 %v489, 4294901760
    %v793 = vsub.f32 %v489, %v792
    %v794 = vand.u32 %v793, 4294901760
    %795 = vmatpush1.xpose.msra.mxu0 %v794
    %796 = vmatprep.subr.mxu0 0.0
    %797 = vmatpush1.xpose.msra.mxu0 0.0
    %798 = vmatprep.subr.mxu0 0.0
    %799 = vmatpush1.xpose.msra.mxu0 0.0
    %800 = vmatprep.subr.mxu0 0.0
    %801 = vmatpush1.xpose.msra.mxu0 0.0
    %802 = vmatprep.subr.mxu0 0.0
    %803 = vmatpush1.xpose.msra.mxu0 0.0
    %804 = vmatprep.subr.mxu0 0.0
    %805 = vmatpush1.xpose.msra.mxu0 0.0
    %806 = vmatprep.subr.mxu0 0.0
    %807 = vmatpush1.xpose.msra.mxu0 0.0
    %808 = vmatprep.subr.mxu0 0.0
    %809 = vmatpush1.xpose.msra.mxu0 0.0
    %810 = vmatprep.subr.mxu0 0.0
    %811 = vmatpush1.xpose.msra.mxu0 0.0
    %812 = vmatprep.subr.mxu0 0.0
    %813 = vmatpush1.xpose.msra.mxu0 0.0
    %814 = vmatprep.subr.mxu0 0.0
    %815 = vmatpush1.xpose.msra.mxu0 0.0
    %816 = vmatprep.subr.mxu0 0.0
    %817 = vmatpush1.xpose.msra.mxu0 0.0
    %818 = vmatprep.subr.mxu0 0.0
    %819 = vmatpush1.xpose.msra.mxu0 0.0
    %820 = vmatprep.subr.mxu0 0.0
    %821 = vmatpush1.xpose.msra.mxu0 0.0
    %822 = vmatprep.subr.mxu0 0.0
    %823 = vmatpush1.xpose.msra.mxu0 0.0
    %824 = vmatprep.subr.mxu0 0.0
    %825 = vmatpush1.xpose.msra.mxu0 0.0
    %826 = vmatprep.subr.mxu0 0.0
    %827 = vmatpush1.xpose.msra.mxu0 0.0
    %828 = vmatprep.subr.mxu0 0.0
    %829 = vmatpush1.xpose.msra.mxu0 0.0
    %830 = vmatprep.subr.mxu0 0.0
    %831 = vmatpush1.xpose.msra.mxu0 0.0
    %832 = vmatprep.subr.mxu0 0.0
    %833 = vmatpush1.xpose.msra.mxu0 0.0
    %834 = vmatprep.subr.mxu0 0.0
    %835 = vmatpush1.xpose.msra.mxu0 0.0
    %836 = vmatprep.subr.mxu0 0.0
    %837 = vmatpush1.xpose.msra.mxu0 0.0
    %838 = vmatprep.subr.mxu0 0.0
    %839 = vmatpush1.xpose.msra.mxu0 0.0
    %840 = vmatprep.subr.mxu0 0.0
    %841 = vmatpush1.xpose.msra.mxu0 0.0
    %842 = vmatprep.subr.mxu0 0.0
    %843 = vmatpush1.xpose.msra.mxu0 0.0
    %844 = vmatprep.subr.mxu0 0.0
    %845 = vmatpush1.xpose.msra.mxu0 0.0
    %846 = vmatprep.subr.mxu0 0.0
    %847 = vmatpush1.xpose.msra.mxu0 0.0
    %848 = vmatprep.subr.mxu0 0.0
    %849 = vmatpush1.xpose.msra.mxu0 0.0
    %850 = vmatprep.subr.mxu0 0.0
    %851 = vmatpush1.xpose.msra.mxu0 0.0
    %852 = vmatprep.subr.mxu0 0.0
    %853 = vmatpush1.xpose.msra.mxu0 0.0
    %854 = vmatprep.subr.mxu0 0.0
    %855 = vmatpush1.xpose.msra.mxu0 0.0
    %856 = vmatprep.subr.mxu0 0.0
    %857 = vmatpush1.xpose.msra.mxu0 0.0
    %858 = vmatprep.mubr.f32.mxu0 0.0
    %v859 = vand.u32 %v37, 4294901760
    %860 = vmatmul.mubr.f32.gmra.mrb[0].mxu0 %v859
    %v861 = vpop.f32.mrb[0].mxu0
    %v862 = vadd.f32 %v788, %v861
    %v863 = vpop.f32.mrb[0].mxu0
    %864 = vdwg.mxu0
    %865 = vmatprep.subr.mxu0 0.0
    %v866 = vand.u32 %v489, 4294901760
    %867 = vmatpush1.xpose.msra.mxu0 %v866
    %868 = vmatprep.subr.mxu0 0.0
    %869 = vmatpush1.xpose.msra.mxu0 0.0
    %870 = vmatprep.subr.mxu0 0.0
    %871 = vmatpush1.xpose.msra.mxu0 0.0
    %872 = vmatprep.subr.mxu0 0.0
    %873 = vmatpush1.xpose.msra.mxu0 0.0
    %874 = vmatprep.subr.mxu0 0.0
    %875 = vmatpush1.xpose.msra.mxu0 0.0
    %876 = vmatprep.subr.mxu0 0.0
    %877 = vmatpush1.xpose.msra.mxu0 0.0
    %878 = vmatprep.subr.mxu0 0.0
    %879 = vmatpush1.xpose.msra.mxu0 0.0
    %880 = vmatprep.subr.mxu0 0.0
    %881 = vmatpush1.xpose.msra.mxu0 0.0
    %882 = vmatprep.subr.mxu0 0.0
    %883 = vmatpush1.xpose.msra.mxu0 0.0
    %884 = vmatprep.subr.mxu0 0.0
    %885 = vmatpush1.xpose.msra.mxu0 0.0
    %886 = vmatprep.subr.mxu0 0.0
    %887 = vmatpush1.xpose.msra.mxu0 0.0
    %888 = vmatprep.subr.mxu0 0.0
    %889 = vmatpush1.xpose.msra.mxu0 0.0
    %890 = vmatprep.subr.mxu0 0.0
    %891 = vmatpush1.xpose.msra.mxu0 0.0
    %892 = vmatprep.subr.mxu0 0.0
    %893 = vmatpush1.xpose.msra.mxu0 0.0
    %894 = vmatprep.subr.mxu0 0.0
    %895 = vmatpush1.xpose.msra.mxu0 0.0
    %896 = vmatprep.subr.mxu0 0.0
    %897 = vmatpush1.xpose.msra.mxu0 0.0
    %898 = vmatprep.subr.mxu0 0.0
    %899 = vmatpush1.xpose.msra.mxu0 0.0
    %900 = vmatprep.subr.mxu0 0.0
    %901 = vmatpush1.xpose.msra.mxu0 0.0
    %902 = vmatprep.subr.mxu0 0.0
    %903 = vmatpush1.xpose.msra.mxu0 0.0
    %904 = vmatprep.subr.mxu0 0.0
    %905 = vmatpush1.xpose.msra.mxu0 0.0
    %906 = vmatprep.subr.mxu0 0.0
    %907 = vmatpush1.xpose.msra.mxu0 0.0
    %908 = vmatprep.subr.mxu0 0.0
    %909 = vmatpush1.xpose.msra.mxu0 0.0
    %910 = vmatprep.subr.mxu0 0.0
    %911 = vmatpush1.xpose.msra.mxu0 0.0
    %912 = vmatprep.subr.mxu0 0.0
    %913 = vmatpush1.xpose.msra.mxu0 0.0
    %914 = vmatprep.subr.mxu0 0.0
    %915 = vmatpush1.xpose.msra.mxu0 0.0
    %916 = vmatprep.subr.mxu0 0.0
    %917 = vmatpush1.xpose.msra.mxu0 0.0
    %918 = vmatprep.subr.mxu0 0.0
    %919 = vmatpush1.xpose.msra.mxu0 0.0
    %920 = vmatprep.subr.mxu0 0.0
    %921 = vmatpush1.xpose.msra.mxu0 0.0
    %922 = vmatprep.subr.mxu0 0.0
    %923 = vmatpush1.xpose.msra.mxu0 0.0
    %924 = vmatprep.subr.mxu0 0.0
    %925 = vmatpush1.xpose.msra.mxu0 0.0
    %926 = vmatprep.subr.mxu0 0.0
    %927 = vmatpush1.xpose.msra.mxu0 0.0
    %928 = vmatprep.subr.mxu0 0.0
    %929 = vmatpush1.xpose.msra.mxu0 0.0
    %930 = vmatprep.mubr.f32.mxu0 0.0
    %v931 = vand.u32 %v37, 4294901760
    %932 = vmatmul.mubr.f32.gmra.mrb[0].mxu0 %v931
    %v933 = vpop.f32.mrb[0].mxu0
    %v934 = vadd.f32 %v862, %v933
    %v935 = vpop.f32.mrb[0].mxu0
    %936 = vdwg.mxu0
    %v937 = vtanh.pop %v485
    %v938 = vtanh.pop %v934
    %v939 = vmul.f32 %v937, 1.442695
    %v940 = vpow.pop %v939
    %v941 = vmul.f32 %v938, 1.442695
    %v942 = vpow.pop %v941
    %vm943 = vcmask 57344
    %v944 = vsel %vm943, %v940, 0.0
    %945 = vadd.xlane.f32.xlu0 %v944
    %v946 = vpop.xlane.xlu0 %945
    %v947 = vsel %vm943, %v942, 0.0
    %948 = vadd.xlane.f32.xlu0 %v947
    %v949 = vpop.xlane.xlu0 %948
    %v950 = vrcp.pop %v946
    %v951 = vrcp.pop %v949
    %v952 = vmul.f32 %v940, %v950
    %v953 = vmul.f32 %v942, %v951
    %v954 = vadd.f32 %v952, 1e-10
    %v955 = vadd.f32 %v953, 1e-10
    %vm956 = vcmask 64512
    %v958 = vsel %vm956, %v954, 0
    %960 = vmatprep.subr.mxu0 0.0
    %v961 = vand.u32 %v30, 4294901760
    %962 = vmatpush1.msra.mxu0 %v961
    %963 = vmatprep.subr.mxu0 0.0
    %964 = vmatpush1.msra.mxu0 0.0
    %965 = vmatprep.subr.mxu0 0.0
    %966 = vmatpush1.msra.mxu0 0.0
    %967 = vmatprep.subr.mxu0 0.0
    %968 = vmatpush1.msra.mxu0 0.0
    %969 = vmatprep.subr.mxu0 0.0
    %970 = vmatpush1.msra.mxu0 0.0
    %971 = vmatprep.subr.mxu0 0.0
    %972 = vmatpush1.msra.mxu0 0.0
    %973 = vmatprep.subr.mxu0 0.0
    %974 = vmatpush1.msra.mxu0 0.0
    %975 = vmatprep.subr.mxu0 0.0
    %976 = vmatpush1.msra.mxu0 0.0
    %977 = vmatprep.subr.mxu0 0.0
    %978 = vmatpush1.msra.mxu0 0.0
    %979 = vmatprep.subr.mxu0 0.0
    %980 = vmatpush1.msra.mxu0 0.0
    %981 = vmatprep.subr.mxu0 0.0
    %982 = vmatpush1.msra.mxu0 0.0
    %983 = vmatprep.subr.mxu0 0.0
    %984 = vmatpush1.msra.mxu0 0.0
    %985 = vmatprep.subr.mxu0 0.0
    %986 = vmatpush1.msra.mxu0 0.0
    %987 = vmatprep.subr.mxu0 0.0
    %988 = vmatpush1.msra.mxu0 0.0
    %989 = vmatprep.subr.mxu0 0.0
    %990 = vmatpush1.msra.mxu0 0.0
    %991 = vmatprep.subr.mxu0 0.0
    %992 = vmatpush1.msra.mxu0 0.0
    %993 = vmatprep.subr.mxu0 0.0
    %994 = vmatpush1.msra.mxu0 0.0
    %995 = vmatprep.subr.mxu0 0.0
    %996 = vmatpush1.msra.mxu0 0.0
    %997 = vmatprep.subr.mxu0 0.0
    %998 = vmatpush1.msra.mxu0 0.0
    %999 = vmatprep.subr.mxu0 0.0
    %1000 = vmatpush1.msra.mxu0 0.0
    %1001 = vmatprep.subr.mxu0 0.0
    %1002 = vmatpush1.msra.mxu0 0.0
    %1003 = vmatprep.subr.mxu0 0.0
    %1004 = vmatpush1.msra.mxu0 0.0
    %1005 = vmatprep.subr.mxu0 0.0
    %1006 = vmatpush1.msra.mxu0 0.0
    %1007 = vmatprep.subr.mxu0 0.0
    %1008 = vmatpush1.msra.mxu0 0.0
    %1009 = vmatprep.subr.mxu0 0.0
    %1010 = vmatpush1.msra.mxu0 0.0
    %1011 = vmatprep.subr.mxu0 0.0
    %1012 = vmatpush1.msra.mxu0 0.0
    %1013 = vmatprep.subr.mxu0 0.0
    %1014 = vmatpush1.msra.mxu0 0.0
    %1015 = vmatprep.subr.mxu0 0.0
    %1016 = vmatpush1.msra.mxu0 0.0
    %1017 = vmatprep.subr.mxu0 0.0
    %1018 = vmatpush1.msra.mxu0 0.0
    %1019 = vmatprep.subr.mxu0 0.0
    %1020 = vmatpush1.msra.mxu0 0.0
    %1021 = vmatprep.subr.mxu0 0.0
    %1022 = vmatpush1.msra.mxu0 0.0
    %1023 = vmatprep.subr.mxu0 0.0
    %1024 = vmatpush1.msra.mxu0 0.0
    %1025 = vmatprep.mubr.f32.mxu0 0.0
    %v1026 = vand.u32 %v958, 4294901760
    %v1027 = vsub.f32 %v958, %v1026
    %v1028 = vand.u32 %v1027, 4294901760
    %v1029 = vsub.f32 %v1027, %v1028
    %v1030 = vand.u32 %v1029, 4294901760
    %1031 = vmatmul.mubr.f32.gmra.mrb[0].mxu0 %v1030
    %v1032 = vpop.f32.mrb[0].mxu0
    %v1033 = vadd.f32 0.0, %v1032
    %v1034 = vpop.f32.mrb[0].mxu0
    %1035 = vdwg.mxu0
    %1036 = vmatprep.subr.mxu0 0.0
    %v1037 = vand.u32 %v30, 4294901760
    %v1038 = vsub.f32 %v30, %v1037
    %v1039 = vand.u32 %v1038, 4294901760
    %v1040 = vsub.f32 %v1038, %v1039
    %v1041 = vand.u32 %v1040, 4294901760
    %1042 = vmatpush1.msra.mxu0 %v1041
    %1043 = vmatprep.subr.mxu0 0.0
    %1044 = vmatpush1.msra.mxu0 0.0
    %1045 = vmatprep.subr.mxu0 0.0
    %1046 = vmatpush1.msra.mxu0 0.0
    %1047 = vmatprep.subr.mxu0 0.0
    %1048 = vmatpush1.msra.mxu0 0.0
    %1049 = vmatprep.subr.mxu0 0.0
    %1050 = vmatpush1.msra.mxu0 0.0
    %1051 = vmatprep.subr.mxu0 0.0
    %1052 = vmatpush1.msra.mxu0 0.0
    %1053 = vmatprep.subr.mxu0 0.0
    %1054 = vmatpush1.msra.mxu0 0.0
    %1055 = vmatprep.subr.mxu0 0.0
    %1056 = vmatpush1.msra.mxu0 0.0
    %1057 = vmatprep.subr.mxu0 0.0
    %1058 = vmatpush1.msra.mxu0 0.0
    %1059 = vmatprep.subr.mxu0 0.0
    %1060 = vmatpush1.msra.mxu0 0.0
    %1061 = vmatprep.subr.mxu0 0.0
    %1062 = vmatpush1.msra.mxu0 0.0
    %1063 = vmatprep.subr.mxu0 0.0
    %1064 = vmatpush1.msra.mxu0 0.0
    %1065 = vmatprep.subr.mxu0 0.0
    %1066 = vmatpush1.msra.mxu0 0.0
    %1067 = vmatprep.subr.mxu0 0.0
    %1068 = vmatpush1.msra.mxu0 0.0
    %1069 = vmatprep.subr.mxu0 0.0
    %1070 = vmatpush1.msra.mxu0 0.0
    %1071 = vmatprep.subr.mxu0 0.0
    %1072 = vmatpush1.msra.mxu0 0.0
    %1073 = vmatprep.subr.mxu0 0.0
    %1074 = vmatpush1.msra.mxu0 0.0
    %1075 = vmatprep.subr.mxu0 0.0
    %1076 = vmatpush1.msra.mxu0 0.0
    %1077 = vmatprep.subr.mxu0 0.0
    %1078 = vmatpush1.msra.mxu0 0.0
    %1079 = vmatprep.subr.mxu0 0.0
    %1080 = vmatpush1.msra.mxu0 0.0
    %1081 = vmatprep.subr.mxu0 0.0
    %1082 = vmatpush1.msra.mxu0 0.0
    %1083 = vmatprep.subr.mxu0 0.0
    %1084 = vmatpush1.msra.mxu0 0.0
    %1085 = vmatprep.subr.mxu0 0.0
    %1086 = vmatpush1.msra.mxu0 0.0
    %1087 = vmatprep.subr.mxu0 0.0
    %1088 = vmatpush1.msra.mxu0 0.0
    %1089 = vmatprep.subr.mxu0 0.0
    %1090 = vmatpush1.msra.mxu0 0.0
    %1091 = vmatprep.subr.mxu0 0.0
    %1092 = vmatpush1.msra.mxu0 0.0
    %1093 = vmatprep.subr.mxu0 0.0
    %1094 = vmatpush1.msra.mxu0 0.0
    %1095 = vmatprep.subr.mxu0 0.0
    %1096 = vmatpush1.msra.mxu0 0.0
    %1097 = vmatprep.subr.mxu0 0.0
    %1098 = vmatpush1.msra.mxu0 0.0
    %1099 = vmatprep.subr.mxu0 0.0
    %1100 = vmatpush1.msra.mxu0 0.0
    %1101 = vmatprep.subr.mxu0 0.0
    %1102 = vmatpush1.msra.mxu0 0.0
    %1103 = vmatprep.subr.mxu0 0.0
    %1104 = vmatpush1.msra.mxu0 0.0
    %1105 = vmatprep.mubr.f32.mxu0 0.0
    %v1106 = vand.u32 %v958, 4294901760
    %1107 = vmatmul.mubr.f32.gmra.mrb[0].mxu0 %v1106
    %v1108 = vpop.f32.mrb[0].mxu0
    %v1109 = vadd.f32 %v1033, %v1108
    %v1110 = vpop.f32.mrb[0].mxu0
    %1111 = vdwg.mxu0
    %1112 = vmatprep.subr.mxu0 0.0
    %v1113 = vand.u32 %v30, 4294901760
    %v1114 = vsub.f32 %v30, %v1113
    %1115 = vmatpush1.msra.mxu0 %v1114
    %1116 = vmatprep.subr.mxu0 0.0
    %1117 = vmatpush1.msra.mxu0 0.0
    %1118 = vmatprep.subr.mxu0 0.0
    %1119 = vmatpush1.msra.mxu0 0.0
    %1120 = vmatprep.subr.mxu0 0.0
    %1121 = vmatpush1.msra.mxu0 0.0
    %1122 = vmatprep.subr.mxu0 0.0
    %1123 = vmatpush1.msra.mxu0 0.0
    %1124 = vmatprep.subr.mxu0 0.0
    %1125 = vmatpush1.msra.mxu0 0.0
    %1126 = vmatprep.subr.mxu0 0.0
    %1127 = vmatpush1.msra.mxu0 0.0
    %1128 = vmatprep.subr.mxu0 0.0
    %1129 = vmatpush1.msra.mxu0 0.0
    %1130 = vmatprep.subr.mxu0 0.0
    %1131 = vmatpush1.msra.mxu0 0.0
    %1132 = vmatprep.subr.mxu0 0.0
    %1133 = vmatpush1.msra.mxu0 0.0
    %1134 = vmatprep.subr.mxu0 0.0
    %1135 = vmatpush1.msra.mxu0 0.0
    %1136 = vmatprep.subr.mxu0 0.0
    %1137 = vmatpush1.msra.mxu0 0.0
    %1138 = vmatprep.subr.mxu0 0.0
    %1139 = vmatpush1.msra.mxu0 0.0
    %1140 = vmatprep.subr.mxu0 0.0
    %1141 = vmatpush1.msra.mxu0 0.0
    %1142 = vmatprep.subr.mxu0 0.0
    %1143 = vmatpush1.msra.mxu0 0.0
    %1144 = vmatprep.subr.mxu0 0.0
    %1145 = vmatpush1.msra.mxu0 0.0
    %1146 = vmatprep.subr.mxu0 0.0
    %1147 = vmatpush1.msra.mxu0 0.0
    %1148 = vmatprep.subr.mxu0 0.0
    %1149 = vmatpush1.msra.mxu0 0.0
    %1150 = vmatprep.subr.mxu0 0.0
    %1151 = vmatpush1.msra.mxu0 0.0
    %1152 = vmatprep.subr.mxu0 0.0
    %1153 = vmatpush1.msra.mxu0 0.0
    %1154 = vmatprep.subr.mxu0 0.0
    %1155 = vmatpush1.msra.mxu0 0.0
    %1156 = vmatprep.subr.mxu0 0.0
    %1157 = vmatpush1.msra.mxu0 0.0
    %1158 = vmatprep.subr.mxu0 0.0
    %1159 = vmatpush1.msra.mxu0 0.0
    %1160 = vmatprep.subr.mxu0 0.0
    %1161 = vmatpush1.msra.mxu0 0.0
    %1162 = vmatprep.subr.mxu0 0.0
    %1163 = vmatpush1.msra.mxu0 0.0
    %1164 = vmatprep.subr.mxu0 0.0
    %1165 = vmatpush1.msra.mxu0 0.0
    %1166 = vmatprep.subr.mxu0 0.0
    %1167 = vmatpush1.msra.mxu0 0.0
    %1168 = vmatprep.subr.mxu0 0.0
    %1169 = vmatpush1.msra.mxu0 0.0
    %1170 = vmatprep.subr.mxu0 0.0
    %1171 = vmatpush1.msra.mxu0 0.0
    %1172 = vmatprep.subr.mxu0 0.0
    %1173 = vmatpush1.msra.mxu0 0.0
    %1174 = vmatprep.subr.mxu0 0.0
    %1175 = vmatpush1.msra.mxu0 0.0
    %1176 = vmatprep.subr.mxu0 0.0
    %1177 = vmatpush1.msra.mxu0 0.0
    %1178 = vmatprep.mubr.f32.mxu0 0.0
    %v1179 = vand.u32 %v958, 4294901760
    %v1180 = vsub.f32 %v958, %v1179
    %1181 = vmatmul.mubr.f32.gmra.mrb[0].mxu0 %v1180
    %v1182 = vpop.f32.mrb[0].mxu0
    %v1183 = vadd.f32 %v1109, %v1182
    %v1184 = vpop.f32.mrb[0].mxu0
    %1185 = vdwg.mxu0
    %1186 = vmatprep.subr.mxu0 0.0
    %v1187 = vand.u32 %v30, 4294901760
    %1188 = vmatpush1.msra.mxu0 %v1187
    %1189 = vmatprep.subr.mxu0 0.0
    %1190 = vmatpush1.msra.mxu0 0.0
    %1191 = vmatprep.subr.mxu0 0.0
    %1192 = vmatpush1.msra.mxu0 0.0
    %1193 = vmatprep.subr.mxu0 0.0
    %1194 = vmatpush1.msra.mxu0 0.0
    %1195 = vmatprep.subr.mxu0 0.0
    %1196 = vmatpush1.msra.mxu0 0.0
    %1197 = vmatprep.subr.mxu0 0.0
    %1198 = vmatpush1.msra.mxu0 0.0
    %1199 = vmatprep.subr.mxu0 0.0
    %1200 = vmatpush1.msra.mxu0 0.0
    %1201 = vmatprep.subr.mxu0 0.0
    %1202 = vmatpush1.msra.mxu0 0.0
    %1203 = vmatprep.subr.mxu0 0.0
    %1204 = vmatpush1.msra.mxu0 0.0
    %1205 = vmatprep.subr.mxu0 0.0
    %1206 = vmatpush1.msra.mxu0 0.0
    %1207 = vmatprep.subr.mxu0 0.0
    %1208 = vmatpush1.msra.mxu0 0.0
    %1209 = vmatprep.subr.mxu0 0.0
    %1210 = vmatpush1.msra.mxu0 0.0
    %1211 = vmatprep.subr.mxu0 0.0
    %1212 = vmatpush1.msra.mxu0 0.0
    %1213 = vmatprep.subr.mxu0 0.0
    %1214 = vmatpush1.msra.mxu0 0.0
    %1215 = vmatprep.subr.mxu0 0.0
    %1216 = vmatpush1.msra.mxu0 0.0
    %1217 = vmatprep.subr.mxu0 0.0
    %1218 = vmatpush1.msra.mxu0 0.0
    %1219 = vmatprep.subr.mxu0 0.0
    %1220 = vmatpush1.msra.mxu0 0.0
    %1221 = vmatprep.subr.mxu0 0.0
    %1222 = vmatpush1.msra.mxu0 0.0
    %1223 = vmatprep.subr.mxu0 0.0
    %1224 = vmatpush1.msra.mxu0 0.0
    %1225 = vmatprep.subr.mxu0 0.0
    %1226 = vmatpush1.msra.mxu0 0.0
    %1227 = vmatprep.subr.mxu0 0.0
    %1228 = vmatpush1.msra.mxu0 0.0
    %1229 = vmatprep.subr.mxu0 0.0
    %1230 = vmatpush1.msra.mxu0 0.0
    %1231 = vmatprep.subr.mxu0 0.0
    %1232 = vmatpush1.msra.mxu0 0.0
    %1233 = vmatprep.subr.mxu0 0.0
    %1234 = vmatpush1.msra.mxu0 0.0
    %1235 = vmatprep.subr.mxu0 0.0
    %1236 = vmatpush1.msra.mxu0 0.0
    %1237 = vmatprep.subr.mxu0 0.0
    %1238 = vmatpush1.msra.mxu0 0.0
    %1239 = vmatprep.subr.mxu0 0.0
    %1240 = vmatpush1.msra.mxu0 0.0
    %1241 = vmatprep.subr.mxu0 0.0
    %1242 = vmatpush1.msra.mxu0 0.0
    %1243 = vmatprep.subr.mxu0 0.0
    %1244 = vmatpush1.msra.mxu0 0.0
    %1245 = vmatprep.subr.mxu0 0.0
    %1246 = vmatpush1.msra.mxu0 0.0
    %1247 = vmatprep.subr.mxu0 0.0
    %1248 = vmatpush1.msra.mxu0 0.0
    %1249 = vmatprep.subr.mxu0 0.0
    %1250 = vmatpush1.msra.mxu0 0.0
    %1251 = vmatprep.mubr.f32.mxu0 0.0
    %v1252 = vand.u32 %v958, 4294901760
    %v1253 = vsub.f32 %v958, %v1252
    %v1254 = vand.u32 %v1253, 4294901760
    %1255 = vmatmul.mubr.f32.gmra.mrb[0].mxu0 %v1254
    %v1256 = vpop.f32.mrb[0].mxu0
    %v1257 = vadd.f32 %v1183, %v1256
    %v1258 = vpop.f32.mrb[0].mxu0
    %1259 = vdwg.mxu0
    %1260 = vmatprep.subr.mxu0 0.0
    %v1261 = vand.u32 %v30, 4294901760
    %v1262 = vsub.f32 %v30, %v1261
    %v1263 = vand.u32 %v1262, 4294901760
    %1264 = vmatpush1.msra.mxu0 %v1263
    %1265 = vmatprep.subr.mxu0 0.0
    %1266 = vmatpush1.msra.mxu0 0.0
    %1267 = vmatprep.subr.mxu0 0.0
    %1268 = vmatpush1.msra.mxu0 0.0
    %1269 = vmatprep.subr.mxu0 0.0
    %1270 = vmatpush1.msra.mxu0 0.0
    %1271 = vmatprep.subr.mxu0 0.0
    %1272 = vmatpush1.msra.mxu0 0.0
    %1273 = vmatprep.subr.mxu0 0.0
    %1274 = vmatpush1.msra.mxu0 0.0
    %1275 = vmatprep.subr.mxu0 0.0
    %1276 = vmatpush1.msra.mxu0 0.0
    %1277 = vmatprep.subr.mxu0 0.0
    %1278 = vmatpush1.msra.mxu0 0.0
    %1279 = vmatprep.subr.mxu0 0.0
    %1280 = vmatpush1.msra.mxu0 0.0
    %1281 = vmatprep.subr.mxu0 0.0
    %1282 = vmatpush1.msra.mxu0 0.0
    %1283 = vmatprep.subr.mxu0 0.0
    %1284 = vmatpush1.msra.mxu0 0.0
    %1285 = vmatprep.subr.mxu0 0.0
    %1286 = vmatpush1.msra.mxu0 0.0
    %1287 = vmatprep.subr.mxu0 0.0
    %1288 = vmatpush1.msra.mxu0 0.0
    %1289 = vmatprep.subr.mxu0 0.0
    %1290 = vmatpush1.msra.mxu0 0.0
    %1291 = vmatprep.subr.mxu0 0.0
    %1292 = vmatpush1.msra.mxu0 0.0
    %1293 = vmatprep.subr.mxu0 0.0
    %1294 = vmatpush1.msra.mxu0 0.0
    %1295 = vmatprep.subr.mxu0 0.0
    %1296 = vmatpush1.msra.mxu0 0.0
    %1297 = vmatprep.subr.mxu0 0.0
    %1298 = vmatpush1.msra.mxu0 0.0
    %1299 = vmatprep.subr.mxu0 0.0
    %1300 = vmatpush1.msra.mxu0 0.0
    %1301 = vmatprep.subr.mxu0 0.0
    %1302 = vmatpush1.msra.mxu0 0.0
    %1303 = vmatprep.subr.mxu0 0.0
    %1304 = vmatpush1.msra.mxu0 0.0
    %1305 = vmatprep.subr.mxu0 0.0
    %1306 = vmatpush1.msra.mxu0 0.0
    %1307 = vmatprep.subr.mxu0 0.0
    %1308 = vmatpush1.msra.mxu0 0.0
    %1309 = vmatprep.subr.mxu0 0.0
    %1310 = vmatpush1.msra.mxu0 0.0
    %1311 = vmatprep.subr.mxu0 0.0
    %1312 = vmatpush1.msra.mxu0 0.0
    %1313 = vmatprep.subr.mxu0 0.0
    %1314 = vmatpush1.msra.mxu0 0.0
    %1315 = vmatprep.subr.mxu0 0.0
    %1316 = vmatpush1.msra.mxu0 0.0
    %1317 = vmatprep.subr.mxu0 0.0
    %1318 = vmatpush1.msra.mxu0 0.0
    %1319 = vmatprep.subr.mxu0 0.0
    %1320 = vmatpush1.msra.mxu0 0.0
    %1321 = vmatprep.subr.mxu0 0.0
    %1322 = vmatpush1.msra.mxu0 0.0
    %1323 = vmatprep.subr.mxu0 0.0
    %1324 = vmatpush1.msra.mxu0 0.0
    %1325 = vmatprep.subr.mxu0 0.0
    %1326 = vmatpush1.msra.mxu0 0.0
    %1327 = vmatprep.mubr.f32.mxu0 0.0
    %v1328 = vand.u32 %v958, 4294901760
    %1329 = vmatmul.mubr.f32.gmra.mrb[0].mxu0 %v1328
    %v1330 = vpop.f32.mrb[0].mxu0
    %v1331 = vadd.f32 %v1257, %v1330
    %v1332 = vpop.f32.mrb[0].mxu0
    %1333 = vdwg.mxu0
    %1334 = vmatprep.subr.mxu0 0.0
    %v1335 = vand.u32 %v30, 4294901760
    %1336 = vmatpush1.msra.mxu0 %v1335
    %1337 = vmatprep.subr.mxu0 0.0
    %1338 = vmatpush1.msra.mxu0 0.0
    %1339 = vmatprep.subr.mxu0 0.0
    %1340 = vmatpush1.msra.mxu0 0.0
    %1341 = vmatprep.subr.mxu0 0.0
    %1342 = vmatpush1.msra.mxu0 0.0
    %1343 = vmatprep.subr.mxu0 0.0
    %1344 = vmatpush1.msra.mxu0 0.0
    %1345 = vmatprep.subr.mxu0 0.0
    %1346 = vmatpush1.msra.mxu0 0.0
    %1347 = vmatprep.subr.mxu0 0.0
    %1348 = vmatpush1.msra.mxu0 0.0
    %1349 = vmatprep.subr.mxu0 0.0
    %1350 = vmatpush1.msra.mxu0 0.0
    %1351 = vmatprep.subr.mxu0 0.0
    %1352 = vmatpush1.msra.mxu0 0.0
    %1353 = vmatprep.subr.mxu0 0.0
    %1354 = vmatpush1.msra.mxu0 0.0
    %1355 = vmatprep.subr.mxu0 0.0
    %1356 = vmatpush1.msra.mxu0 0.0
    %1357 = vmatprep.subr.mxu0 0.0
    %1358 = vmatpush1.msra.mxu0 0.0
    %1359 = vmatprep.subr.mxu0 0.0
    %1360 = vmatpush1.msra.mxu0 0.0
    %1361 = vmatprep.subr.mxu0 0.0
    %1362 = vmatpush1.msra.mxu0 0.0
    %1363 = vmatprep.subr.mxu0 0.0
    %1364 = vmatpush1.msra.mxu0 0.0
    %1365 = vmatprep.subr.mxu0 0.0
    %1366 = vmatpush1.msra.mxu0 0.0
    %1367 = vmatprep.subr.mxu0 0.0
    %1368 = vmatpush1.msra.mxu0 0.0
    %1369 = vmatprep.subr.mxu0 0.0
    %1370 = vmatpush1.msra.mxu0 0.0
    %1371 = vmatprep.subr.mxu0 0.0
    %1372 = vmatpush1.msra.mxu0 0.0
    %1373 = vmatprep.subr.mxu0 0.0
    %1374 = vmatpush1.msra.mxu0 0.0
    %1375 = vmatprep.subr.mxu0 0.0
    %1376 = vmatpush1.msra.mxu0 0.0
    %1377 = vmatprep.subr.mxu0 0.0
    %1378 = vmatpush1.msra.mxu0 0.0
    %1379 = vmatprep.subr.mxu0 0.0
    %1380 = vmatpush1.msra.mxu0 0.0
    %1381 = vmatprep.subr.mxu0 0.0
    %1382 = vmatpush1.msra.mxu0 0.0
    %1383 = vmatprep.subr.mxu0 0.0
    %1384 = vmatpush1.msra.mxu0 0.0
    %1385 = vmatprep.subr.mxu0 0.0
    %1386 = vmatpush1.msra.mxu0 0.0
    %1387 = vmatprep.subr.mxu0 0.0
    %1388 = vmatpush1.msra.mxu0 0.0
    %1389 = vmatprep.subr.mxu0 0.0
    %1390 = vmatpush1.msra.mxu0 0.0
    %1391 = vmatprep.subr.mxu0 0.0
    %1392 = vmatpush1.msra.mxu0 0.0
    %1393 = vmatprep.subr.mxu0 0.0
    %1394 = vmatpush1.msra.mxu0 0.0
    %1395 = vmatprep.subr.mxu0 0.0
    %1396 = vmatpush1.msra.mxu0 0.0
    %1397 = vmatprep.subr.mxu0 0.0
    %1398 = vmatpush1.msra.mxu0 0.0
    %1399 = vmatprep.mubr.f32.mxu0 0.0
    %v1400 = vand.u32 %v958, 4294901760
    %1401 = vmatmul.mubr.f32.gmra.mrb[0].mxu0 %v1400
    %v1402 = vpop.f32.mrb[0].mxu0
    %v1403 = vadd.f32 %v1331, %v1402
    %v1404 = vpop.f32.mrb[0].mxu0
    %1405 = vdwg.mxu0
    %v1407 = vsel %vm956, %v955, 0
    %1409 = vmatprep.subr.mxu0 0.0
    %v1410 = vand.u32 %v31, 4294901760
    %1411 = vmatpush1.msra.mxu0 %v1410
    %1412 = vmatprep.subr.mxu0 0.0
    %1413 = vmatpush1.msra.mxu0 0.0
    %1414 = vmatprep.subr.mxu0 0.0
    %1415 = vmatpush1.msra.mxu0 0.0
    %1416 = vmatprep.subr.mxu0 0.0
    %1417 = vmatpush1.msra.mxu0 0.0
    %1418 = vmatprep.subr.mxu0 0.0
    %1419 = vmatpush1.msra.mxu0 0.0
    %1420 = vmatprep.subr.mxu0 0.0
    %1421 = vmatpush1.msra.mxu0 0.0
    %1422 = vmatprep.subr.mxu0 0.0
    %1423 = vmatpush1.msra.mxu0 0.0
    %1424 = vmatprep.subr.mxu0 0.0
    %1425 = vmatpush1.msra.mxu0 0.0
    %1426 = vmatprep.subr.mxu0 0.0
    %1427 = vmatpush1.msra.mxu0 0.0
    %1428 = vmatprep.subr.mxu0 0.0
    %1429 = vmatpush1.msra.mxu0 0.0
    %1430 = vmatprep.subr.mxu0 0.0
    %1431 = vmatpush1.msra.mxu0 0.0
    %1432 = vmatprep.subr.mxu0 0.0
    %1433 = vmatpush1.msra.mxu0 0.0
    %1434 = vmatprep.subr.mxu0 0.0
    %1435 = vmatpush1.msra.mxu0 0.0
    %1436 = vmatprep.subr.mxu0 0.0
    %1437 = vmatpush1.msra.mxu0 0.0
    %1438 = vmatprep.subr.mxu0 0.0
    %1439 = vmatpush1.msra.mxu0 0.0
    %1440 = vmatprep.subr.mxu0 0.0
    %1441 = vmatpush1.msra.mxu0 0.0
    %1442 = vmatprep.subr.mxu0 0.0
    %1443 = vmatpush1.msra.mxu0 0.0
    %1444 = vmatprep.subr.mxu0 0.0
    %1445 = vmatpush1.msra.mxu0 0.0
    %1446 = vmatprep.subr.mxu0 0.0
    %1447 = vmatpush1.msra.mxu0 0.0
    %1448 = vmatprep.subr.mxu0 0.0
    %1449 = vmatpush1.msra.mxu0 0.0
    %1450 = vmatprep.subr.mxu0 0.0
    %1451 = vmatpush1.msra.mxu0 0.0
    %1452 = vmatprep.subr.mxu0 0.0
    %1453 = vmatpush1.msra.mxu0 0.0
    %1454 = vmatprep.subr.mxu0 0.0
    %1455 = vmatpush1.msra.mxu0 0.0
    %1456 = vmatprep.subr.mxu0 0.0
    %1457 = vmatpush1.msra.mxu0 0.0
    %1458 = vmatprep.subr.mxu0 0.0
    %1459 = vmatpush1.msra.mxu0 0.0
    %1460 = vmatprep.subr.mxu0 0.0
    %1461 = vmatpush1.msra.mxu0 0.0
    %1462 = vmatprep.subr.mxu0 0.0
    %1463 = vmatpush1.msra.mxu0 0.0
    %1464 = vmatprep.subr.mxu0 0.0
    %1465 = vmatpush1.msra.mxu0 0.0
    %1466 = vmatprep.subr.mxu0 0.0
    %1467 = vmatpush1.msra.mxu0 0.0
    %1468 = vmatprep.subr.mxu0 0.0
    %1469 = vmatpush1.msra.mxu0 0.0
    %1470 = vmatprep.subr.mxu0 0.0
    %1471 = vmatpush1.msra.mxu0 0.0
    %1472 = vmatprep.subr.mxu0 0.0
    %1473 = vmatpush1.msra.mxu0 0.0
    %1474 = vmatprep.mubr.f32.mxu0 0.0
    %v1475 = vand.u32 %v1407, 4294901760
    %v1476 = vsub.f32 %v1407, %v1475
    %v1477 = vand.u32 %v1476, 4294901760
    %v1478 = vsub.f32 %v1476, %v1477
    %v1479 = vand.u32 %v1478, 4294901760
    %1480 = vmatmul.mubr.f32.gmra.mrb[0].mxu0 %v1479
    %v1481 = vpop.f32.mrb[0].mxu0
    %v1482 = vadd.f32 0.0, %v1481
    %v1483 = vpop.f32.mrb[0].mxu0
    %1484 = vdwg.mxu0
    %1485 = vmatprep.subr.mxu0 0.0
    %v1486 = vand.u32 %v31, 4294901760
    %v1487 = vsub.f32 %v31, %v1486
    %v1488 = vand.u32 %v1487, 4294901760
    %v1489 = vsub.f32 %v1487, %v1488
    %v1490 = vand.u32 %v1489, 4294901760
    %1491 = vmatpush1.msra.mxu0 %v1490
    %1492 = vmatprep.subr.mxu0 0.0
    %1493 = vmatpush1.msra.mxu0 0.0
    %1494 = vmatprep.subr.mxu0 0.0
    %1495 = vmatpush1.msra.mxu0 0.0
    %1496 = vmatprep.subr.mxu0 0.0
    %1497 = vmatpush1.msra.mxu0 0.0
    %1498 = vmatprep.subr.mxu0 0.0
    %1499 = vmatpush1.msra.mxu0 0.0
    %1500 = vmatprep.subr.mxu0 0.0
    %1501 = vmatpush1.msra.mxu0 0.0
    %1502 = vmatprep.subr.mxu0 0.0
    %1503 = vmatpush1.msra.mxu0 0.0
    %1504 = vmatprep.subr.mxu0 0.0
    %1505 = vmatpush1.msra.mxu0 0.0
    %1506 = vmatprep.subr.mxu0 0.0
    %1507 = vmatpush1.msra.mxu0 0.0
    %1508 = vmatprep.subr.mxu0 0.0
    %1509 = vmatpush1.msra.mxu0 0.0
    %1510 = vmatprep.subr.mxu0 0.0
    %1511 = vmatpush1.msra.mxu0 0.0
    %1512 = vmatprep.subr.mxu0 0.0
    %1513 = vmatpush1.msra.mxu0 0.0
    %1514 = vmatprep.subr.mxu0 0.0
    %1515 = vmatpush1.msra.mxu0 0.0
    %1516 = vmatprep.subr.mxu0 0.0
    %1517 = vmatpush1.msra.mxu0 0.0
    %1518 = vmatprep.subr.mxu0 0.0
    %1519 = vmatpush1.msra.mxu0 0.0
    %1520 = vmatprep.subr.mxu0 0.0
    %1521 = vmatpush1.msra.mxu0 0.0
    %1522 = vmatprep.subr.mxu0 0.0
    %1523 = vmatpush1.msra.mxu0 0.0
    %1524 = vmatprep.subr.mxu0 0.0
    %1525 = vmatpush1.msra.mxu0 0.0
    %1526 = vmatprep.subr.mxu0 0.0
    %1527 = vmatpush1.msra.mxu0 0.0
    %1528 = vmatprep.subr.mxu0 0.0
    %1529 = vmatpush1.msra.mxu0 0.0
    %1530 = vmatprep.subr.mxu0 0.0
    %1531 = vmatpush1.msra.mxu0 0.0
    %1532 = vmatprep.subr.mxu0 0.0
    %1533 = vmatpush1.msra.mxu0 0.0
    %1534 = vmatprep.subr.mxu0 0.0
    %1535 = vmatpush1.msra.mxu0 0.0
    %1536 = vmatprep.subr.mxu0 0.0
    %1537 = vmatpush1.msra.mxu0 0.0
    %1538 = vmatprep.subr.mxu0 0.0
    %1539 = vmatpush1.msra.mxu0 0.0
    %1540 = vmatprep.subr.mxu0 0.0
    %1541 = vmatpush1.msra.mxu0 0.0
    %1542 = vmatprep.subr.mxu0 0.0
    %1543 = vmatpush1.msra.mxu0 0.0
    %1544 = vmatprep.subr.mxu0 0.0
    %1545 = vmatpush1.msra.mxu0 0.0
    %1546 = vmatprep.subr.mxu0 0.0
    %1547 = vmatpush1.msra.mxu0 0.0
    %1548 = vmatprep.subr.mxu0 0.0
    %1549 = vmatpush1.msra.mxu0 0.0
    %1550 = vmatprep.subr.mxu0 0.0
    %1551 = vmatpush1.msra.mxu0 0.0
    %1552 = vmatprep.subr.mxu0 0.0
    %1553 = vmatpush1.msra.mxu0 0.0
    %1554 = vmatprep.mubr.f32.mxu0 0.0
    %v1555 = vand.u32 %v1407, 4294901760
    %1556 = vmatmul.mubr.f32.gmra.mrb[0].mxu0 %v1555
    %v1557 = vpop.f32.mrb[0].mxu0
    %v1558 = vadd.f32 %v1482, %v1557
    %v1559 = vpop.f32.mrb[0].mxu0
    %1560 = vdwg.mxu0
    %1561 = vmatprep.subr.mxu0 0.0
    %v1562 = vand.u32 %v31, 4294901760
    %v1563 = vsub.f32 %v31, %v1562
    %1564 = vmatpush1.msra.mxu0 %v1563
    %1565 = vmatprep.subr.mxu0 0.0
    %1566 = vmatpush1.msra.mxu0 0.0
    %1567 = vmatprep.subr.mxu0 0.0
    %1568 = vmatpush1.msra.mxu0 0.0
    %1569 = vmatprep.subr.mxu0 0.0
    %1570 = vmatpush1.msra.mxu0 0.0
    %1571 = vmatprep.subr.mxu0 0.0
    %1572 = vmatpush1.msra.mxu0 0.0
    %1573 = vmatprep.subr.mxu0 0.0
    %1574 = vmatpush1.msra.mxu0 0.0
    %1575 = vmatprep.subr.mxu0 0.0
    %1576 = vmatpush1.msra.mxu0 0.0
    %1577 = vmatprep.subr.mxu0 0.0
    %1578 = vmatpush1.msra.mxu0 0.0
    %1579 = vmatprep.subr.mxu0 0.0
    %1580 = vmatpush1.msra.mxu0 0.0
    %1581 = vmatprep.subr.mxu0 0.0
    %1582 = vmatpush1.msra.mxu0 0.0
    %1583 = vmatprep.subr.mxu0 0.0
    %1584 = vmatpush1.msra.mxu0 0.0
    %1585 = vmatprep.subr.mxu0 0.0
    %1586 = vmatpush1.msra.mxu0 0.0
    %1587 = vmatprep.subr.mxu0 0.0
    %1588 = vmatpush1.msra.mxu0 0.0
    %1589 = vmatprep.subr.mxu0 0.0
    %1590 = vmatpush1.msra.mxu0 0.0
    %1591 = vmatprep.subr.mxu0 0.0
    %1592 = vmatpush1.msra.mxu0 0.0
    %1593 = vmatprep.subr.mxu0 0.0
    %1594 = vmatpush1.msra.mxu0 0.0
    %1595 = vmatprep.subr.mxu0 0.0
    %1596 = vmatpush1.msra.mxu0 0.0
    %1597 = vmatprep.subr.mxu0 0.0
    %1598 = vmatpush1.msra.mxu0 0.0
    %1599 = vmatprep.subr.mxu0 0.0
    %1600 = vmatpush1.msra.mxu0 0.0
    %1601 = vmatprep.subr.mxu0 0.0
    %1602 = vmatpush1.msra.mxu0 0.0
    %1603 = vmatprep.subr.mxu0 0.0
    %1604 = vmatpush1.msra.mxu0 0.0
    %1605 = vmatprep.subr.mxu0 0.0
    %1606 = vmatpush1.msra.mxu0 0.0
    %1607 = vmatprep.subr.mxu0 0.0
    %1608 = vmatpush1.msra.mxu0 0.0
    %1609 = vmatprep.subr.mxu0 0.0
    %1610 = vmatpush1.msra.mxu0 0.0
    %1611 = vmatprep.subr.mxu0 0.0
    %1612 = vmatpush1.msra.mxu0 0.0
    %1613 = vmatprep.subr.mxu0 0.0
    %1614 = vmatpush1.msra.mxu0 0.0
    %1615 = vmatprep.subr.mxu0 0.0
    %1616 = vmatpush1.msra.mxu0 0.0
    %1617 = vmatprep.subr.mxu0 0.0
    %1618 = vmatpush1.msra.mxu0 0.0
    %1619 = vmatprep.subr.mxu0 0.0
    %1620 = vmatpush1.msra.mxu0 0.0
    %1621 = vmatprep.subr.mxu0 0.0
    %1622 = vmatpush1.msra.mxu0 0.0
    %1623 = vmatprep.subr.mxu0 0.0
    %1624 = vmatpush1.msra.mxu0 0.0
    %1625 = vmatprep.subr.mxu0 0.0
    %1626 = vmatpush1.msra.mxu0 0.0
    %1627 = vmatprep.mubr.f32.mxu0 0.0
    %v1628 = vand.u32 %v1407, 4294901760
    %v1629 = vsub.f32 %v1407, %v1628
    %1630 = vmatmul.mubr.f32.gmra.mrb[0].mxu0 %v1629
    %v1631 = vpop.f32.mrb[0].mxu0
    %v1632 = vadd.f32 %v1558, %v1631
    %v1633 = vpop.f32.mrb[0].mxu0
    %1634 = vdwg.mxu0
    %1635 = vmatprep.subr.mxu0 0.0
    %v1636 = vand.u32 %v31, 4294901760
    %1637 = vmatpush1.msra.mxu0 %v1636
    %1638 = vmatprep.subr.mxu0 0.0
    %1639 = vmatpush1.msra.mxu0 0.0
    %1640 = vmatprep.subr.mxu0 0.0
    %1641 = vmatpush1.msra.mxu0 0.0
    %1642 = vmatprep.subr.mxu0 0.0
    %1643 = vmatpush1.msra.mxu0 0.0
    %1644 = vmatprep.subr.mxu0 0.0
    %1645 = vmatpush1.msra.mxu0 0.0
    %1646 = vmatprep.subr.mxu0 0.0
    %1647 = vmatpush1.msra.mxu0 0.0
    %1648 = vmatprep.subr.mxu0 0.0
    %1649 = vmatpush1.msra.mxu0 0.0
    %1650 = vmatprep.subr.mxu0 0.0
    %1651 = vmatpush1.msra.mxu0 0.0
    %1652 = vmatprep.subr.mxu0 0.0
    %1653 = vmatpush1.msra.mxu0 0.0
    %1654 = vmatprep.subr.mxu0 0.0
    %1655 = vmatpush1.msra.mxu0 0.0
    %1656 = vmatprep.subr.mxu0 0.0
    %1657 = vmatpush1.msra.mxu0 0.0
    %1658 = vmatprep.subr.mxu0 0.0
    %1659 = vmatpush1.msra.mxu0 0.0
    %1660 = vmatprep.subr.mxu0 0.0
    %1661 = vmatpush1.msra.mxu0 0.0
    %1662 = vmatprep.subr.mxu0 0.0
    %1663 = vmatpush1.msra.mxu0 0.0
    %1664 = vmatprep.subr.mxu0 0.0
    %1665 = vmatpush1.msra.mxu0 0.0
    %1666 = vmatprep.subr.mxu0 0.0
    %1667 = vmatpush1.msra.mxu0 0.0
    %1668 = vmatprep.subr.mxu0 0.0
    %1669 = vmatpush1.msra.mxu0 0.0
    %1670 = vmatprep.subr.mxu0 0.0
    %1671 = vmatpush1.msra.mxu0 0.0
    %1672 = vmatprep.subr.mxu0 0.0
    %1673 = vmatpush1.msra.mxu0 0.0
    %1674 = vmatprep.subr.mxu0 0.0
    %1675 = vmatpush1.msra.mxu0 0.0
    %1676 = vmatprep.subr.mxu0 0.0
    %1677 = vmatpush1.msra.mxu0 0.0
    %1678 = vmatprep.subr.mxu0 0.0
    %1679 = vmatpush1.msra.mxu0 0.0
    %1680 = vmatprep.subr.mxu0 0.0
    %1681 = vmatpush1.msra.mxu0 0.0
    %1682 = vmatprep.subr.mxu0 0.0
    %1683 = vmatpush1.msra.mxu0 0.0
    %1684 = vmatprep.subr.mxu0 0.0
    %1685 = vmatpush1.msra.mxu0 0.0
    %1686 = vmatprep.subr.mxu0 0.0
    %1687 = vmatpush1.msra.mxu0 0.0
    %1688 = vmatprep.subr.mxu0 0.0
    %1689 = vmatpush1.msra.mxu0 0.0
    %1690 = vmatprep.subr.mxu0 0.0
    %1691 = vmatpush1.msra.mxu0 0.0
    %1692 = vmatprep.subr.mxu0 0.0
    %1693 = vmatpush1.msra.mxu0 0.0
    %1694 = vmatprep.subr.mxu0 0.0
    %1695 = vmatpush1.msra.mxu0 0.0
    %1696 = vmatprep.subr.mxu0 0.0
    %1697 = vmatpush1.msra.mxu0 0.0
    %1698 = vmatprep.subr.mxu0 0.0
    %1699 = vmatpush1.msra.mxu0 0.0
    %1700 = vmatprep.mubr.f32.mxu0 0.0
    %v1701 = vand.u32 %v1407, 4294901760
    %v1702 = vsub.f32 %v1407, %v1701
    %v1703 = vand.u32 %v1702, 4294901760
    %1704 = vmatmul.mubr.f32.gmra.mrb[0].mxu0 %v1703
    %v1705 = vpop.f32.mrb[0].mxu0
    %v1706 = vadd.f32 %v1632, %v1705
    %v1707 = vpop.f32.mrb[0].mxu0
    %1708 = vdwg.mxu0
    %1709 = vmatprep.subr.mxu0 0.0
    %v1710 = vand.u32 %v31, 4294901760
    %v1711 = vsub.f32 %v31, %v1710
    %v1712 = vand.u32 %v1711, 4294901760
    %1713 = vmatpush1.msra.mxu0 %v1712
    %1714 = vmatprep.subr.mxu0 0.0
    %1715 = vmatpush1.msra.mxu0 0.0
    %1716 = vmatprep.subr.mxu0 0.0
    %1717 = vmatpush1.msra.mxu0 0.0
    %1718 = vmatprep.subr.mxu0 0.0
    %1719 = vmatpush1.msra.mxu0 0.0
    %1720 = vmatprep.subr.mxu0 0.0
    %1721 = vmatpush1.msra.mxu0 0.0
    %1722 = vmatprep.subr.mxu0 0.0
    %1723 = vmatpush1.msra.mxu0 0.0
    %1724 = vmatprep.subr.mxu0 0.0
    %1725 = vmatpush1.msra.mxu0 0.0
    %1726 = vmatprep.subr.mxu0 0.0
    %1727 = vmatpush1.msra.mxu0 0.0
    %1728 = vmatprep.subr.mxu0 0.0
    %1729 = vmatpush1.msra.mxu0 0.0
    %1730 = vmatprep.subr.mxu0 0.0
    %1731 = vmatpush1.msra.mxu0 0.0
    %1732 = vmatprep.subr.mxu0 0.0
    %1733 = vmatpush1.msra.mxu0 0.0
    %1734 = vmatprep.subr.mxu0 0.0
    %1735 = vmatpush1.msra.mxu0 0.0
    %1736 = vmatprep.subr.mxu0 0.0
    %1737 = vmatpush1.msra.mxu0 0.0
    %1738 = vmatprep.subr.mxu0 0.0
    %1739 = vmatpush1.msra.mxu0 0.0
    %1740 = vmatprep.subr.mxu0 0.0
    %1741 = vmatpush1.msra.mxu0 0.0
    %1742 = vmatprep.subr.mxu0 0.0
    %1743 = vmatpush1.msra.mxu0 0.0
    %1744 = vmatprep.subr.mxu0 0.0
    %1745 = vmatpush1.msra.mxu0 0.0
    %1746 = vmatprep.subr.mxu0 0.0
    %1747 = vmatpush1.msra.mxu0 0.0
    %1748 = vmatprep.subr.mxu0 0.0
    %1749 = vmatpush1.msra.mxu0 0.0
    %1750 = vmatprep.subr.mxu0 0.0
    %1751 = vmatpush1.msra.mxu0 0.0
    %1752 = vmatprep.subr.mxu0 0.0
    %1753 = vmatpush1.msra.mxu0 0.0
    %1754 = vmatprep.subr.mxu0 0.0
    %1755 = vmatpush1.msra.mxu0 0.0
    %1756 = vmatprep.subr.mxu0 0.0
    %1757 = vmatpush1.msra.mxu0 0.0
    %1758 = vmatprep.subr.mxu0 0.0
    %1759 = vmatpush1.msra.mxu0 0.0
    %1760 = vmatprep.subr.mxu0 0.0
    %1761 = vmatpush1.msra.mxu0 0.0
    %1762 = vmatprep.subr.mxu0 0.0
    %1763 = vmatpush1.msra.mxu0 0.0
    %1764 = vmatprep.subr.mxu0 0.0
    %1765 = vmatpush1.msra.mxu0 0.0
    %1766 = vmatprep.subr.mxu0 0.0
    %1767 = vmatpush1.msra.mxu0 0.0
    %1768 = vmatprep.subr.mxu0 0.0
    %1769 = vmatpush1.msra.mxu0 0.0
    %1770 = vmatprep.subr.mxu0 0.0
    %1771 = vmatpush1.msra.mxu0 0.0
    %1772 = vmatprep.subr.mxu0 0.0
    %1773 = vmatpush1.msra.mxu0 0.0
    %1774 = vmatprep.subr.mxu0 0.0
    %1775 = vmatpush1.msra.mxu0 0.0
    %1776 = vmatprep.mubr.f32.mxu0 0.0
    %v1777 = vand.u32 %v1407, 4294901760
    %1778 = vmatmul.mubr.f32.gmra.mrb[0].mxu0 %v1777
    %v1779 = vpop.f32.mrb[0].mxu0
    %v1780 = vadd.f32 %v1706, %v1779
    %v1781 = vpop.f32.mrb[0].mxu0
    %1782 = vdwg.mxu0
    %1783 = vmatprep.subr.mxu0 0.0
    %v1784 = vand.u32 %v31, 4294901760
    %1785 = vmatpush1.msra.mxu0 %v1784
    %1786 = vmatprep.subr.mxu0 0.0
    %1787 = vmatpush1.msra.mxu0 0.0
    %1788 = vmatprep.subr.mxu0 0.0
    %1789 = vmatpush1.msra.mxu0 0.0
    %1790 = vmatprep.subr.mxu0 0.0
    %1791 = vmatpush1.msra.mxu0 0.0
    %1792 = vmatprep.subr.mxu0 0.0
    %1793 = vmatpush1.msra.mxu0 0.0
    %1794 = vmatprep.subr.mxu0 0.0
    %1795 = vmatpush1.msra.mxu0 0.0
    %1796 = vmatprep.subr.mxu0 0.0
    %1797 = vmatpush1.msra.mxu0 0.0
    %1798 = vmatprep.subr.mxu0 0.0
    %1799 = vmatpush1.msra.mxu0 0.0
    %1800 = vmatprep.subr.mxu0 0.0
    %1801 = vmatpush1.msra.mxu0 0.0
    %1802 = vmatprep.subr.mxu0 0.0
    %1803 = vmatpush1.msra.mxu0 0.0
    %1804 = vmatprep.subr.mxu0 0.0
    %1805 = vmatpush1.msra.mxu0 0.0
    %1806 = vmatprep.subr.mxu0 0.0
    %1807 = vmatpush1.msra.mxu0 0.0
    %1808 = vmatprep.subr.mxu0 0.0
    %1809 = vmatpush1.msra.mxu0 0.0
    %1810 = vmatprep.subr.mxu0 0.0
    %1811 = vmatpush1.msra.mxu0 0.0
    %1812 = vmatprep.subr.mxu0 0.0
    %1813 = vmatpush1.msra.mxu0 0.0
    %1814 = vmatprep.subr.mxu0 0.0
    %1815 = vmatpush1.msra.mxu0 0.0
    %1816 = vmatprep.subr.mxu0 0.0
    %1817 = vmatpush1.msra.mxu0 0.0
    %1818 = vmatprep.subr.mxu0 0.0
    %1819 = vmatpush1.msra.mxu0 0.0
    %1820 = vmatprep.subr.mxu0 0.0
    %1821 = vmatpush1.msra.mxu0 0.0
    %1822 = vmatprep.subr.mxu0 0.0
    %1823 = vmatpush1.msra.mxu0 0.0
    %1824 = vmatprep.subr.mxu0 0.0
    %1825 = vmatpush1.msra.mxu0 0.0
    %1826 = vmatprep.subr.mxu0 0.0
    %1827 = vmatpush1.msra.mxu0 0.0
    %1828 = vmatprep.subr.mxu0 0.0
    %1829 = vmatpush1.msra.mxu0 0.0
    %1830 = vmatprep.subr.mxu0 0.0
    %1831 = vmatpush1.msra.mxu0 0.0
    %1832 = vmatprep.subr.mxu0 0.0
    %1833 = vmatpush1.msra.mxu0 0.0
    %1834 = vmatprep.subr.mxu0 0.0
    %1835 = vmatpush1.msra.mxu0 0.0
    %1836 = vmatprep.subr.mxu0 0.0
    %1837 = vmatpush1.msra.mxu0 0.0
    %1838 = vmatprep.subr.mxu0 0.0
    %1839 = vmatpush1.msra.mxu0 0.0
    %1840 = vmatprep.subr.mxu0 0.0
    %1841 = vmatpush1.msra.mxu0 0.0
    %1842 = vmatprep.subr.mxu0 0.0
    %1843 = vmatpush1.msra.mxu0 0.0
    %1844 = vmatprep.subr.mxu0 0.0
    %1845 = vmatpush1.msra.mxu0 0.0
    %1846 = vmatprep.subr.mxu0 0.0
    %1847 = vmatpush1.msra.mxu0 0.0
    %1848 = vmatprep.mubr.f32.mxu0 0.0
    %v1849 = vand.u32 %v1407, 4294901760
    %1850 = vmatmul.mubr.f32.gmra.mrb[0].mxu0 %v1849
    %v1851 = vpop.f32.mrb[0].mxu0
    %v1852 = vadd.f32 %v1780, %v1851
    %v1853 = vpop.f32.mrb[0].mxu0
    %1854 = vdwg.mxu0
    %vm1855 = vcmask 253952
    %1856 = vst.msk [vmem:[#allocation6] sm:$0x1] %vm1855, %v1403
    %1857 = vst.msk [vmem:[#allocation6 + $0x1] sm:$0x1] %vm1855, %v1852
    // Predicated region
    $region18: #{tpu_custom_call.1} parent=1 // pred_check
      _
    $region19: #{tpu_custom_call.1} parent=1 // pred_check_branch
      %1859 = sbr.rel (0) target = $region21
    $region20: #{tpu_custom_call.1} parent=1 // pred_region
      %s1861 = ssub.s32 32, 32
      %1862 = vsyncadd [#allocation5], %s1861
      %s1863 = sshll.u32 [#allocation6], 4
      %s1864 = int_to_ptr.vmem [resolvable:$true] %s1863
      %1869 = dma.vmem_to_hbm [thread:$0]  %s1864, 32, %s3, [#allocation5], 16, 16, 1
    $region21: #{tpu_custom_call.1} parent=1 // pred_fallthru
      _
    // Predicated region
    $region22: #{tpu_custom_call.1} parent=1 // pred_check
      _
    $region23: #{tpu_custom_call.1} parent=1 // pred_check_branch
      %1871 = sbr.rel (0) target = $region25
    $region24: #{tpu_custom_call.1} parent=1 // pred_region
      %1872 = dma.done [#allocation5], 32
    $region25: #{tpu_custom_call.1} parent=1 // pred_fallthru
      _
    %1873 = vsyncpa [#allocation4], 1
    %1874 = vsyncpa [#allocation5], 1

</llo_original>
